<compile_context>
chip_gen: v6e
topology: v6e:2x2x1
jax: 0.10.0
libtpu: 0.0.40
codegen_flags: <defaults>
</compile_context>

<pallas_src>
import functools

import jax
import jax.numpy as jnp
import numpy as np
from jax.experimental import pallas as pl
from jax.experimental.pallas import tpu as pltpu

_BN_EPS = 1e-5
_TAPS = tuple((dh, dw) for dh in (-1, 0, 1) for dw in (-1, 0, 1))


def _preact_block_kernel(x_ref, wa_ref, wb_ref, scale_ref, shift_ref, o_ref,
                         *, H, W, last_relu):
    # x_ref     : (B_blk, Cp, H*W) f32   NCHW block, channels zero-padded to Cp
    # wa_ref    : (9, Cp, Cp)      f32   conv_a taps, [kh*3+kw, c_out, c_in]
    # wb_ref    : (9, Cp, Cp)      f32   conv_b taps
    # scale_ref : (Cp, 1)          f32   fused inference-mode bn_b scale
    # shift_ref : (Cp, 1)          f32   fused inference-mode bn_b shift
    # o_ref     : (B_blk, Cp, H*W) f32   lane-dense (last dim = H*W) output
    B, Cp, M = x_ref.shape

    # ---- boundary masks for the 9 conv taps (computed once, shared) ---------
    m_idx = jax.lax.broadcasted_iota(jnp.int32, (1, M), 1)
    if (W & (W - 1)) == 0:                       # power-of-two W: shift / mask
        h_idx = m_idx >> (W.bit_length() - 1)
        w_idx = m_idx & (W - 1)
    else:                                        # generic fallback
        h_idx = m_idx // W
        w_idx = m_idx - h_idx * W
    masks = []
    for dh, dw in _TAPS:
        conds = []
        if dh < 0:
            conds.append(h_idx >= -dh)
        if dh > 0:
            conds.append(h_idx < H - dh)
        if dw < 0:
            conds.append(w_idx >= -dw)
        if dw > 0:
            conds.append(w_idx < W - dw)
        if conds:
            mask = conds[0]
            for c in conds[1:]:
                mask = jnp.logical_and(mask, c)
            masks.append(mask)
        else:
            masks.append(None)                   # centre tap: always valid

    # ---- hoist weight / BN loads out of the batch loop ----------------------
    wa = [wa_ref[t] for t in range(9)]           # 9 x (Cp, Cp)
    wb = [wb_ref[t] for t in range(9)]
    scale = scale_ref[...]                       # (Cp, 1), broadcasts over lanes
    shift = shift_ref[...]

    def conv3x3(inp, w_taps):
        # inp: (Cp, M) f32.  3x3 SAME conv = 9 x (lane roll + boundary mask +
        # tiny (Cp,Cp)x(Cp,M) MXU matmul), accumulated in registers.
        acc = None
        for t, (dh, dw) in enumerate(_TAPS):
            s = dh * W + dw                      # flat spatial offset of tap
            src = inp if s == 0 else pltpu.roll(inp, shift=(M - s) % M, axis=1)
            if masks[t] is not None:
                src = jnp.where(masks[t], src, 0.0)
            part = jnp.dot(w_taps[t], src, preferred_element_type=jnp.float32)
            acc = part if acc is None else acc + part
        return acc                               # (Cp, M) f32

    # ---- per-image fused block (static unroll over the batch block) ---------
    for b in range(B):
        x_cm = x_ref[b]                                    # (Cp, M)
        ya = conv3x3(x_cm, wa)                             # conv_a
        y = jnp.maximum(ya * scale + shift, 0.0)           # bn_b + relu
        yb = conv3x3(y, wb)                                # conv_b
        out = yb + x_cm                                    # residual add
        if last_relu:
            out = jnp.maximum(out, 0.0)
        o_ref[b] = out.astype(o_ref.dtype)                 # lane-dense store


def _pick_batch_block(n):
    """Largest divisor of n (<= 8); prefer an even grid length (v7x: 2 TCs)."""
    divisors = [d for d in range(1, min(n, 8) + 1) if n % d == 0]
    even_grid = [d for d in divisors if (n // d) % 2 == 0]
    return max(even_grid) if even_grid else max(divisors)


def preact_residual_block(x_nchw, wa_oihw, wb_oihw, gamma, beta,
                          running_mean, running_var, *, last_relu=False,
                          batch_block=None):
    """Fused forward of PreActResidualBlock (increase_dim=False)."""
    N, C, H, W = x_nchw.shape
    HW = H * W
    Cp = -(-C // 8) * 8                    # pad channels to a sublane multiple

    # NCHW -> (N, C, H*W) is a pure reshape (no transpose, no copy semantics).
    x = x_nchw.astype(jnp.float32).reshape(N, C, HW)
    if Cp != C:
        x = jnp.pad(x, ((0, 0), (0, Cp - C), (0, 0)))

    def pack_w(w_oihw):
        # OIHW -> (kh, kw, c_out, c_in) -> (9, Cp, Cp); tap index = kh*3 + kw.
        w = jnp.transpose(w_oihw.astype(jnp.float32), (2, 3, 0, 1)).reshape(9, C, C)
        if Cp != C:
            w = jnp.pad(w, ((0, 0), (0, Cp - C), (0, Cp - C)))
        return w

    wa = pack_w(wa_oihw)
    wb = pack_w(wb_oihw)

    # Fused inference-mode BatchNorm:  bn(v) = v * scale + shift.
    inv = jax.lax.rsqrt(running_var.astype(jnp.float32) + _BN_EPS)
    scale = gamma.astype(jnp.float32) * inv
    shift = beta.astype(jnp.float32) - running_mean.astype(jnp.float32) * scale
    if Cp != C:
        scale = jnp.pad(scale, (0, Cp - C))
        shift = jnp.pad(shift, (0, Cp - C))
    scale = scale.reshape(Cp, 1)
    shift = shift.reshape(Cp, 1)

    b_blk = batch_block if batch_block is not None else _pick_batch_block(N)
    if N % b_blk != 0:
        raise ValueError(f"batch_block={b_blk} must divide N={N}")
    grid = (N // b_blk,)

    out = pl.pallas_call(
        functools.partial(_preact_block_kernel, H=H, W=W, last_relu=last_relu),
        out_shape=jax.ShapeDtypeStruct((N, Cp, HW), jnp.float32),
        grid=grid,
        in_specs=[
            pl.BlockSpec((b_blk, Cp, HW), lambda n: (n, 0, 0)),
            pl.BlockSpec((9, Cp, Cp), lambda n: (0, 0, 0)),
            pl.BlockSpec((9, Cp, Cp), lambda n: (0, 0, 0)),
            pl.BlockSpec((Cp, 1), lambda n: (0, 0)),
            pl.BlockSpec((Cp, 1), lambda n: (0, 0)),
        ],
        out_specs=pl.BlockSpec((b_blk, Cp, HW), lambda n: (n, 0, 0)),
        compiler_params=pltpu.CompilerParams(
            dimension_semantics=("parallel",),
        ),
    )(x, wa, wb, scale, shift)

    # Drop channel padding; (N, C, H*W) -> NCHW is again a pure reshape.
    return out[:, :C, :].reshape(N, C, H, W)


def _reference_forward(x, wa, wb, gamma, beta, mean, var, last_relu):
    """Plain-JAX reference in NCHW, mirrors the PyTorch code exactly."""
    dn = ('NCHW', 'OIHW', 'NCHW')
    y = jax.lax.conv_general_dilated(
        x, wa, window_strides=(1, 1), padding='SAME',
        dimension_numbers=dn, precision=jax.lax.Precision.HIGHEST)
    y = (y - mean[None, :, None, None]) * jax.lax.rsqrt(
        var[None, :, None, None] + _BN_EPS) * gamma[None, :, None, None] \
        + beta[None, :, None, None]
    y = jnp.maximum(y, 0.0)
    y = jax.lax.conv_general_dilated(
        y, wb, window_strides=(1, 1), padding='SAME',
        dimension_numbers=dn, precision=jax.lax.Precision.HIGHEST)
    y = x + y
    if last_relu:
        y = jnp.maximum(y, 0.0)
    return y


if __name__ == "__main__":
    key = jax.random.PRNGKey(0)
    kx, kwa, kwb, kg, kb, km, kv = jax.random.split(key, 7)

    N, C, H, W = 2, 4, 16, 16            # inplanes=4, increase_dim=False

    x = jax.random.normal(kx, (N, C, H, W), dtype=jnp.float32)
    conv_a_w = jax.random.normal(kwa, (C, C, 3, 3), dtype=jnp.float32) * 0.2
    conv_b_w = jax.random.normal(kwb, (C, C, 3, 3), dtype=jnp.float32) * 0.2
    bn_gamma = jax.random.uniform(kg, (C,), minval=0.5, maxval=1.5, dtype=jnp.float32)
    bn_beta = jax.random.normal(kb, (C,), dtype=jnp.float32) * 0.1
    bn_mean = jax.random.normal(km, (C,), dtype=jnp.float32) * 0.1
    bn_var = jax.random.uniform(kv, (C,), minval=0.5, maxval=1.5, dtype=jnp.float32)

    for last_relu in (True, False):
        ref = _reference_forward(x, conv_a_w, conv_b_w, bn_gamma, bn_beta,
                                 bn_mean, bn_var, last_relu)
        out = jax.block_until_ready(preact_residual_block(
            x, conv_a_w, conv_b_w, bn_gamma, bn_beta, bn_mean, bn_var,
            last_relu=last_relu))
        np.testing.assert_allclose(np.asarray(out), np.asarray(ref),
                                   rtol=1e-3, atol=1e-3)

    print("KERNEL_OK")
</pallas_src>

<mosaic_0001>
module attributes {stable_mosaic.version = 11 : i64} {
  func.func @_preact_block_kernel(%arg0: i32, %arg1: memref<1x8x256xf32, #tpu.memory_space<vmem>>, %arg2: memref<9x8x8xf32, #tpu.memory_space<vmem>>, %arg3: memref<9x8x8xf32, #tpu.memory_space<vmem>>, %arg4: memref<8x1xf32, #tpu.memory_space<vmem>>, %arg5: memref<8x1xf32, #tpu.memory_space<vmem>>, %arg6: memref<1x8x256xf32, #tpu.memory_space<vmem>>) attributes {dimension_semantics = [#tpu.dimension_semantics<parallel>], iteration_bounds = array<i64: 2>, scalar_prefetch = 0 : i64, scratch_operands = 0 : i64, tpu.core_type = #tpu.core_type<tc>, window_params = [{transform_indices = @transform_0, window_bounds = array<i64: 1, 8, 256>}, {pipeline_mode = #tpu.pipeline_mode<synchronous>, transform_indices = @transform_1, window_bounds = array<i64: 9, 8, 8>}, {pipeline_mode = #tpu.pipeline_mode<synchronous>, transform_indices = @transform_2, window_bounds = array<i64: 9, 8, 8>}, {pipeline_mode = #tpu.pipeline_mode<synchronous>, transform_indices = @transform_3, window_bounds = array<i64: 8, 1>}, {pipeline_mode = #tpu.pipeline_mode<synchronous>, transform_indices = @transform_4, window_bounds = array<i64: 8, 1>}, {transform_indices = @transform_5, window_bounds = array<i64: 1, 8, 256>}]} {
    %0 = tpu.iota {dimensions = array<i32: 1>} : vector<1x256xi32>
    %c4_i32 = arith.constant 4 : i32
    %1 = vector.broadcast %c4_i32 : i32 to vector<1x256xi32>
    %2 = arith.shrsi %0, %1 : vector<1x256xi32>
    %c15_i32 = arith.constant 15 : i32
    %3 = vector.broadcast %c15_i32 : i32 to vector<1x256xi32>
    %4 = arith.andi %0, %3 : vector<1x256xi32>
    %c1_i32 = arith.constant 1 : i32
    %5 = vector.broadcast %c1_i32 : i32 to vector<1x256xi32>
    %6 = arith.cmpi sge, %2, %5 : vector<1x256xi32>
    %c1_i32_0 = arith.constant 1 : i32
    %7 = vector.broadcast %c1_i32_0 : i32 to vector<1x256xi32>
    %8 = arith.cmpi sge, %4, %7 : vector<1x256xi32>
    %9 = arith.andi %6, %8 : vector<1x256xi1>
    %c1_i32_1 = arith.constant 1 : i32
    %10 = vector.broadcast %c1_i32_1 : i32 to vector<1x256xi32>
    %11 = arith.cmpi sge, %2, %10 : vector<1x256xi32>
    %c1_i32_2 = arith.constant 1 : i32
    %12 = vector.broadcast %c1_i32_2 : i32 to vector<1x256xi32>
    %13 = arith.cmpi sge, %2, %12 : vector<1x256xi32>
    %c15_i32_3 = arith.constant 15 : i32
    %14 = vector.broadcast %c15_i32_3 : i32 to vector<1x256xi32>
    %15 = arith.cmpi slt, %4, %14 : vector<1x256xi32>
    %16 = arith.andi %13, %15 : vector<1x256xi1>
    %c1_i32_4 = arith.constant 1 : i32
    %17 = vector.broadcast %c1_i32_4 : i32 to vector<1x256xi32>
    %18 = arith.cmpi sge, %4, %17 : vector<1x256xi32>
    %c15_i32_5 = arith.constant 15 : i32
    %19 = vector.broadcast %c15_i32_5 : i32 to vector<1x256xi32>
    %20 = arith.cmpi slt, %4, %19 : vector<1x256xi32>
    %c15_i32_6 = arith.constant 15 : i32
    %21 = vector.broadcast %c15_i32_6 : i32 to vector<1x256xi32>
    %22 = arith.cmpi slt, %2, %21 : vector<1x256xi32>
    %c1_i32_7 = arith.constant 1 : i32
    %23 = vector.broadcast %c1_i32_7 : i32 to vector<1x256xi32>
    %24 = arith.cmpi sge, %4, %23 : vector<1x256xi32>
    %25 = arith.andi %22, %24 : vector<1x256xi1>
    %c15_i32_8 = arith.constant 15 : i32
    %26 = vector.broadcast %c15_i32_8 : i32 to vector<1x256xi32>
    %27 = arith.cmpi slt, %2, %26 : vector<1x256xi32>
    %c15_i32_9 = arith.constant 15 : i32
    %28 = vector.broadcast %c15_i32_9 : i32 to vector<1x256xi32>
    %29 = arith.cmpi slt, %2, %28 : vector<1x256xi32>
    %c15_i32_10 = arith.constant 15 : i32
    %30 = vector.broadcast %c15_i32_10 : i32 to vector<1x256xi32>
    %31 = arith.cmpi slt, %4, %30 : vector<1x256xi32>
    %32 = arith.andi %29, %31 : vector<1x256xi1>
    %c0 = arith.constant 0 : index
    %c0_11 = arith.constant 0 : index
    %c0_12 = arith.constant 0 : index
    %33 = vector.load %arg2[%c0, %c0_11, %c0_12] : memref<9x8x8xf32, #tpu.memory_space<vmem>>, vector<1x8x8xf32>
    %34 = vector.shape_cast %33 : vector<1x8x8xf32> to vector<8x8xf32>
    %c1 = arith.constant 1 : index
    %c0_13 = arith.constant 0 : index
    %c0_14 = arith.constant 0 : index
    %35 = vector.load %arg2[%c1, %c0_13, %c0_14] : memref<9x8x8xf32, #tpu.memory_space<vmem>>, vector<1x8x8xf32>
    %36 = vector.shape_cast %35 : vector<1x8x8xf32> to vector<8x8xf32>
    %c2 = arith.constant 2 : index
    %c0_15 = arith.constant 0 : index
    %c0_16 = arith.constant 0 : index
    %37 = vector.load %arg2[%c2, %c0_15, %c0_16] : memref<9x8x8xf32, #tpu.memory_space<vmem>>, vector<1x8x8xf32>
    %38 = vector.shape_cast %37 : vector<1x8x8xf32> to vector<8x8xf32>
    %c3 = arith.constant 3 : index
    %c0_17 = arith.constant 0 : index
    %c0_18 = arith.constant 0 : index
    %39 = vector.load %arg2[%c3, %c0_17, %c0_18] : memref<9x8x8xf32, #tpu.memory_space<vmem>>, vector<1x8x8xf32>
    %40 = vector.shape_cast %39 : vector<1x8x8xf32> to vector<8x8xf32>
    %c4 = arith.constant 4 : index
    %c0_19 = arith.constant 0 : index
    %c0_20 = arith.constant 0 : index
    %41 = vector.load %arg2[%c4, %c0_19, %c0_20] : memref<9x8x8xf32, #tpu.memory_space<vmem>>, vector<1x8x8xf32>
    %42 = vector.shape_cast %41 : vector<1x8x8xf32> to vector<8x8xf32>
    %c5 = arith.constant 5 : index
    %c0_21 = arith.constant 0 : index
    %c0_22 = arith.constant 0 : index
    %43 = vector.load %arg2[%c5, %c0_21, %c0_22] : memref<9x8x8xf32, #tpu.memory_space<vmem>>, vector<1x8x8xf32>
    %44 = vector.shape_cast %43 : vector<1x8x8xf32> to vector<8x8xf32>
    %c6 = arith.constant 6 : index
    %c0_23 = arith.constant 0 : index
    %c0_24 = arith.constant 0 : index
    %45 = vector.load %arg2[%c6, %c0_23, %c0_24] : memref<9x8x8xf32, #tpu.memory_space<vmem>>, vector<1x8x8xf32>
    %46 = vector.shape_cast %45 : vector<1x8x8xf32> to vector<8x8xf32>
    %c7 = arith.constant 7 : index
    %c0_25 = arith.constant 0 : index
    %c0_26 = arith.constant 0 : index
    %47 = vector.load %arg2[%c7, %c0_25, %c0_26] : memref<9x8x8xf32, #tpu.memory_space<vmem>>, vector<1x8x8xf32>
    %48 = vector.shape_cast %47 : vector<1x8x8xf32> to vector<8x8xf32>
    %c8 = arith.constant 8 : index
    %c0_27 = arith.constant 0 : index
    %c0_28 = arith.constant 0 : index
    %49 = vector.load %arg2[%c8, %c0_27, %c0_28] : memref<9x8x8xf32, #tpu.memory_space<vmem>>, vector<1x8x8xf32>
    %50 = vector.shape_cast %49 : vector<1x8x8xf32> to vector<8x8xf32>
    %c0_29 = arith.constant 0 : index
    %c0_30 = arith.constant 0 : index
    %c0_31 = arith.constant 0 : index
    %51 = vector.load %arg3[%c0_29, %c0_30, %c0_31] : memref<9x8x8xf32, #tpu.memory_space<vmem>>, vector<1x8x8xf32>
    %52 = vector.shape_cast %51 : vector<1x8x8xf32> to vector<8x8xf32>
    %c1_32 = arith.constant 1 : index
    %c0_33 = arith.constant 0 : index
    %c0_34 = arith.constant 0 : index
    %53 = vector.load %arg3[%c1_32, %c0_33, %c0_34] : memref<9x8x8xf32, #tpu.memory_space<vmem>>, vector<1x8x8xf32>
    %54 = vector.shape_cast %53 : vector<1x8x8xf32> to vector<8x8xf32>
    %c2_35 = arith.constant 2 : index
    %c0_36 = arith.constant 0 : index
    %c0_37 = arith.constant 0 : index
    %55 = vector.load %arg3[%c2_35, %c0_36, %c0_37] : memref<9x8x8xf32, #tpu.memory_space<vmem>>, vector<1x8x8xf32>
    %56 = vector.shape_cast %55 : vector<1x8x8xf32> to vector<8x8xf32>
    %c3_38 = arith.constant 3 : index
    %c0_39 = arith.constant 0 : index
    %c0_40 = arith.constant 0 : index
    %57 = vector.load %arg3[%c3_38, %c0_39, %c0_40] : memref<9x8x8xf32, #tpu.memory_space<vmem>>, vector<1x8x8xf32>
    %58 = vector.shape_cast %57 : vector<1x8x8xf32> to vector<8x8xf32>
    %c4_41 = arith.constant 4 : index
    %c0_42 = arith.constant 0 : index
    %c0_43 = arith.constant 0 : index
    %59 = vector.load %arg3[%c4_41, %c0_42, %c0_43] : memref<9x8x8xf32, #tpu.memory_space<vmem>>, vector<1x8x8xf32>
    %60 = vector.shape_cast %59 : vector<1x8x8xf32> to vector<8x8xf32>
    %c5_44 = arith.constant 5 : index
    %c0_45 = arith.constant 0 : index
    %c0_46 = arith.constant 0 : index
    %61 = vector.load %arg3[%c5_44, %c0_45, %c0_46] : memref<9x8x8xf32, #tpu.memory_space<vmem>>, vector<1x8x8xf32>
    %62 = vector.shape_cast %61 : vector<1x8x8xf32> to vector<8x8xf32>
    %c6_47 = arith.constant 6 : index
    %c0_48 = arith.constant 0 : index
    %c0_49 = arith.constant 0 : index
    %63 = vector.load %arg3[%c6_47, %c0_48, %c0_49] : memref<9x8x8xf32, #tpu.memory_space<vmem>>, vector<1x8x8xf32>
    %64 = vector.shape_cast %63 : vector<1x8x8xf32> to vector<8x8xf32>
    %c7_50 = arith.constant 7 : index
    %c0_51 = arith.constant 0 : index
    %c0_52 = arith.constant 0 : index
    %65 = vector.load %arg3[%c7_50, %c0_51, %c0_52] : memref<9x8x8xf32, #tpu.memory_space<vmem>>, vector<1x8x8xf32>
    %66 = vector.shape_cast %65 : vector<1x8x8xf32> to vector<8x8xf32>
    %c8_53 = arith.constant 8 : index
    %c0_54 = arith.constant 0 : index
    %c0_55 = arith.constant 0 : index
    %67 = vector.load %arg3[%c8_53, %c0_54, %c0_55] : memref<9x8x8xf32, #tpu.memory_space<vmem>>, vector<1x8x8xf32>
    %68 = vector.shape_cast %67 : vector<1x8x8xf32> to vector<8x8xf32>
    %c0_56 = arith.constant 0 : index
    %c0_57 = arith.constant 0 : index
    %69 = vector.load %arg4[%c0_56, %c0_57] : memref<8x1xf32, #tpu.memory_space<vmem>>, vector<8x1xf32>
    %c0_58 = arith.constant 0 : index
    %c0_59 = arith.constant 0 : index
    %70 = vector.load %arg5[%c0_58, %c0_59] : memref<8x1xf32, #tpu.memory_space<vmem>>, vector<8x1xf32>
    %c0_60 = arith.constant 0 : index
    %c0_61 = arith.constant 0 : index
    %c0_62 = arith.constant 0 : index
    %71 = vector.load %arg1[%c0_60, %c0_61, %c0_62] : memref<1x8x256xf32, #tpu.memory_space<vmem>>, vector<1x8x256xf32>
    %72 = vector.shape_cast %71 : vector<1x8x256xf32> to vector<8x256xf32>
    %c17_i32 = arith.constant 17 : i32
    %73 = tpu.dynamic_rotate %72 by %c17_i32 dim 1 : vector<8x256xf32>, i32 -> vector<8x256xf32>
    %cst = arith.constant 0.000000e+00 : f32
    %74 = vector.shape_cast %9 : vector<1x256xi1> to vector<1x256xi1>
    %75 = vector.broadcast %74 : vector<1x256xi1> to vector<8x256xi1>
    %76 = vector.broadcast %cst : f32 to vector<8x256xf32>
    %77 = arith.select %75, %73, %76 : vector<8x256xi1>, vector<8x256xf32>
    %cst_63 = arith.constant dense<0.000000e+00> : vector<8x256xf32>
    %78 = tpu.matmul %34, %77, %cst_63 {dimension_numbers = #tpu.dot_dimension_numbers<[1], [0], [0], [1], [0, 0, 1, 1], [], []>} : vector<8x8xf32>, vector<8x256xf32>, vector<8x256xf32> -> vector<8x256xf32>
    %c16_i32 = arith.constant 16 : i32
    %79 = tpu.dynamic_rotate %72 by %c16_i32 dim 1 : vector<8x256xf32>, i32 -> vector<8x256xf32>
    %cst_64 = arith.constant 0.000000e+00 : f32
    %80 = vector.shape_cast %11 : vector<1x256xi1> to vector<1x256xi1>
    %81 = vector.broadcast %80 : vector<1x256xi1> to vector<8x256xi1>
    %82 = vector.broadcast %cst_64 : f32 to vector<8x256xf32>
    %83 = arith.select %81, %79, %82 : vector<8x256xi1>, vector<8x256xf32>
    %cst_65 = arith.constant dense<0.000000e+00> : vector<8x256xf32>
    %84 = tpu.matmul %36, %83, %cst_65 {dimension_numbers = #tpu.dot_dimension_numbers<[1], [0], [0], [1], [0, 0, 1, 1], [], []>} : vector<8x8xf32>, vector<8x256xf32>, vector<8x256xf32> -> vector<8x256xf32>
    %85 = arith.addf %78, %84 : vector<8x256xf32>
    %c15_i32_66 = arith.constant 15 : i32
    %86 = tpu.dynamic_rotate %72 by %c15_i32_66 dim 1 : vector<8x256xf32>, i32 -> vector<8x256xf32>
    %cst_67 = arith.constant 0.000000e+00 : f32
    %87 = vector.shape_cast %16 : vector<1x256xi1> to vector<1x256xi1>
    %88 = vector.broadcast %87 : vector<1x256xi1> to vector<8x256xi1>
    %89 = vector.broadcast %cst_67 : f32 to vector<8x256xf32>
    %90 = arith.select %88, %86, %89 : vector<8x256xi1>, vector<8x256xf32>
    %cst_68 = arith.constant dense<0.000000e+00> : vector<8x256xf32>
    %91 = tpu.matmul %38, %90, %cst_68 {dimension_numbers = #tpu.dot_dimension_numbers<[1], [0], [0], [1], [0, 0, 1, 1], [], []>} : vector<8x8xf32>, vector<8x256xf32>, vector<8x256xf32> -> vector<8x256xf32>
    %92 = arith.addf %85, %91 : vector<8x256xf32>
    %c1_i32_69 = arith.constant 1 : i32
    %93 = tpu.dynamic_rotate %72 by %c1_i32_69 dim 1 : vector<8x256xf32>, i32 -> vector<8x256xf32>
    %cst_70 = arith.constant 0.000000e+00 : f32
    %94 = vector.shape_cast %18 : vector<1x256xi1> to vector<1x256xi1>
    %95 = vector.broadcast %94 : vector<1x256xi1> to vector<8x256xi1>
    %96 = vector.broadcast %cst_70 : f32 to vector<8x256xf32>
    %97 = arith.select %95, %93, %96 : vector<8x256xi1>, vector<8x256xf32>
    %cst_71 = arith.constant dense<0.000000e+00> : vector<8x256xf32>
    %98 = tpu.matmul %40, %97, %cst_71 {dimension_numbers = #tpu.dot_dimension_numbers<[1], [0], [0], [1], [0, 0, 1, 1], [], []>} : vector<8x8xf32>, vector<8x256xf32>, vector<8x256xf32> -> vector<8x256xf32>
    %99 = arith.addf %92, %98 : vector<8x256xf32>
    %cst_72 = arith.constant dense<0.000000e+00> : vector<8x256xf32>
    %100 = tpu.matmul %42, %72, %cst_72 {dimension_numbers = #tpu.dot_dimension_numbers<[1], [0], [0], [1], [0, 0, 1, 1], [], []>} : vector<8x8xf32>, vector<8x256xf32>, vector<8x256xf32> -> vector<8x256xf32>
    %101 = arith.addf %99, %100 : vector<8x256xf32>
    %c255_i32 = arith.constant 255 : i32
    %102 = tpu.dynamic_rotate %72 by %c255_i32 dim 1 : vector<8x256xf32>, i32 -> vector<8x256xf32>
    %cst_73 = arith.constant 0.000000e+00 : f32
    %103 = vector.shape_cast %20 : vector<1x256xi1> to vector<1x256xi1>
    %104 = vector.broadcast %103 : vector<1x256xi1> to vector<8x256xi1>
    %105 = vector.broadcast %cst_73 : f32 to vector<8x256xf32>
    %106 = arith.select %104, %102, %105 : vector<8x256xi1>, vector<8x256xf32>
    %cst_74 = arith.constant dense<0.000000e+00> : vector<8x256xf32>
    %107 = tpu.matmul %44, %106, %cst_74 {dimension_numbers = #tpu.dot_dimension_numbers<[1], [0], [0], [1], [0, 0, 1, 1], [], []>} : vector<8x8xf32>, vector<8x256xf32>, vector<8x256xf32> -> vector<8x256xf32>
    %108 = arith.addf %101, %107 : vector<8x256xf32>
    %c241_i32 = arith.constant 241 : i32
    %109 = tpu.dynamic_rotate %72 by %c241_i32 dim 1 : vector<8x256xf32>, i32 -> vector<8x256xf32>
    %cst_75 = arith.constant 0.000000e+00 : f32
    %110 = vector.shape_cast %25 : vector<1x256xi1> to vector<1x256xi1>
    %111 = vector.broadcast %110 : vector<1x256xi1> to vector<8x256xi1>
    %112 = vector.broadcast %cst_75 : f32 to vector<8x256xf32>
    %113 = arith.select %111, %109, %112 : vector<8x256xi1>, vector<8x256xf32>
    %cst_76 = arith.constant dense<0.000000e+00> : vector<8x256xf32>
    %114 = tpu.matmul %46, %113, %cst_76 {dimension_numbers = #tpu.dot_dimension_numbers<[1], [0], [0], [1], [0, 0, 1, 1], [], []>} : vector<8x8xf32>, vector<8x256xf32>, vector<8x256xf32> -> vector<8x256xf32>
    %115 = arith.addf %108, %114 : vector<8x256xf32>
    %c240_i32 = arith.constant 240 : i32
    %116 = tpu.dynamic_rotate %72 by %c240_i32 dim 1 : vector<8x256xf32>, i32 -> vector<8x256xf32>
    %cst_77 = arith.constant 0.000000e+00 : f32
    %117 = vector.shape_cast %27 : vector<1x256xi1> to vector<1x256xi1>
    %118 = vector.broadcast %117 : vector<1x256xi1> to vector<8x256xi1>
    %119 = vector.broadcast %cst_77 : f32 to vector<8x256xf32>
    %120 = arith.select %118, %116, %119 : vector<8x256xi1>, vector<8x256xf32>
    %cst_78 = arith.constant dense<0.000000e+00> : vector<8x256xf32>
    %121 = tpu.matmul %48, %120, %cst_78 {dimension_numbers = #tpu.dot_dimension_numbers<[1], [0], [0], [1], [0, 0, 1, 1], [], []>} : vector<8x8xf32>, vector<8x256xf32>, vector<8x256xf32> -> vector<8x256xf32>
    %122 = arith.addf %115, %121 : vector<8x256xf32>
    %c239_i32 = arith.constant 239 : i32
    %123 = tpu.dynamic_rotate %72 by %c239_i32 dim 1 : vector<8x256xf32>, i32 -> vector<8x256xf32>
    %cst_79 = arith.constant 0.000000e+00 : f32
    %124 = vector.shape_cast %32 : vector<1x256xi1> to vector<1x256xi1>
    %125 = vector.broadcast %124 : vector<1x256xi1> to vector<8x256xi1>
    %126 = vector.broadcast %cst_79 : f32 to vector<8x256xf32>
    %127 = arith.select %125, %123, %126 : vector<8x256xi1>, vector<8x256xf32>
    %cst_80 = arith.constant dense<0.000000e+00> : vector<8x256xf32>
    %128 = tpu.matmul %50, %127, %cst_80 {dimension_numbers = #tpu.dot_dimension_numbers<[1], [0], [0], [1], [0, 0, 1, 1], [], []>} : vector<8x8xf32>, vector<8x256xf32>, vector<8x256xf32> -> vector<8x256xf32>
    %129 = arith.addf %122, %128 : vector<8x256xf32>
    %130 = vector.broadcast %69 : vector<8x1xf32> to vector<8x256xf32>
    %131 = arith.mulf %129, %130 : vector<8x256xf32>
    %132 = vector.broadcast %70 : vector<8x1xf32> to vector<8x256xf32>
    %133 = arith.addf %131, %132 : vector<8x256xf32>
    %cst_81 = arith.constant 0.000000e+00 : f32
    %134 = vector.broadcast %cst_81 : f32 to vector<8x256xf32>
    %135 = arith.maximumf %133, %134 : vector<8x256xf32>
    %c17_i32_82 = arith.constant 17 : i32
    %136 = tpu.dynamic_rotate %135 by %c17_i32_82 dim 1 : vector<8x256xf32>, i32 -> vector<8x256xf32>
    %cst_83 = arith.constant 0.000000e+00 : f32
    %137 = vector.shape_cast %9 : vector<1x256xi1> to vector<1x256xi1>
    %138 = vector.broadcast %137 : vector<1x256xi1> to vector<8x256xi1>
    %139 = vector.broadcast %cst_83 : f32 to vector<8x256xf32>
    %140 = arith.select %138, %136, %139 : vector<8x256xi1>, vector<8x256xf32>
    %cst_84 = arith.constant dense<0.000000e+00> : vector<8x256xf32>
    %141 = tpu.matmul %52, %140, %cst_84 {dimension_numbers = #tpu.dot_dimension_numbers<[1], [0], [0], [1], [0, 0, 1, 1], [], []>} : vector<8x8xf32>, vector<8x256xf32>, vector<8x256xf32> -> vector<8x256xf32>
    %c16_i32_85 = arith.constant 16 : i32
    %142 = tpu.dynamic_rotate %135 by %c16_i32_85 dim 1 : vector<8x256xf32>, i32 -> vector<8x256xf32>
    %cst_86 = arith.constant 0.000000e+00 : f32
    %143 = vector.shape_cast %11 : vector<1x256xi1> to vector<1x256xi1>
    %144 = vector.broadcast %143 : vector<1x256xi1> to vector<8x256xi1>
    %145 = vector.broadcast %cst_86 : f32 to vector<8x256xf32>
    %146 = arith.select %144, %142, %145 : vector<8x256xi1>, vector<8x256xf32>
    %cst_87 = arith.constant dense<0.000000e+00> : vector<8x256xf32>
    %147 = tpu.matmul %54, %146, %cst_87 {dimension_numbers = #tpu.dot_dimension_numbers<[1], [0], [0], [1], [0, 0, 1, 1], [], []>} : vector<8x8xf32>, vector<8x256xf32>, vector<8x256xf32> -> vector<8x256xf32>
    %148 = arith.addf %141, %147 : vector<8x256xf32>
    %c15_i32_88 = arith.constant 15 : i32
    %149 = tpu.dynamic_rotate %135 by %c15_i32_88 dim 1 : vector<8x256xf32>, i32 -> vector<8x256xf32>
    %cst_89 = arith.constant 0.000000e+00 : f32
    %150 = vector.shape_cast %16 : vector<1x256xi1> to vector<1x256xi1>
    %151 = vector.broadcast %150 : vector<1x256xi1> to vector<8x256xi1>
    %152 = vector.broadcast %cst_89 : f32 to vector<8x256xf32>
    %153 = arith.select %151, %149, %152 : vector<8x256xi1>, vector<8x256xf32>
    %cst_90 = arith.constant dense<0.000000e+00> : vector<8x256xf32>
    %154 = tpu.matmul %56, %153, %cst_90 {dimension_numbers = #tpu.dot_dimension_numbers<[1], [0], [0], [1], [0, 0, 1, 1], [], []>} : vector<8x8xf32>, vector<8x256xf32>, vector<8x256xf32> -> vector<8x256xf32>
    %155 = arith.addf %148, %154 : vector<8x256xf32>
    %c1_i32_91 = arith.constant 1 : i32
    %156 = tpu.dynamic_rotate %135 by %c1_i32_91 dim 1 : vector<8x256xf32>, i32 -> vector<8x256xf32>
    %cst_92 = arith.constant 0.000000e+00 : f32
    %157 = vector.shape_cast %18 : vector<1x256xi1> to vector<1x256xi1>
    %158 = vector.broadcast %157 : vector<1x256xi1> to vector<8x256xi1>
    %159 = vector.broadcast %cst_92 : f32 to vector<8x256xf32>
    %160 = arith.select %158, %156, %159 : vector<8x256xi1>, vector<8x256xf32>
    %cst_93 = arith.constant dense<0.000000e+00> : vector<8x256xf32>
    %161 = tpu.matmul %58, %160, %cst_93 {dimension_numbers = #tpu.dot_dimension_numbers<[1], [0], [0], [1], [0, 0, 1, 1], [], []>} : vector<8x8xf32>, vector<8x256xf32>, vector<8x256xf32> -> vector<8x256xf32>
    %162 = arith.addf %155, %161 : vector<8x256xf32>
    %cst_94 = arith.constant dense<0.000000e+00> : vector<8x256xf32>
    %163 = tpu.matmul %60, %135, %cst_94 {dimension_numbers = #tpu.dot_dimension_numbers<[1], [0], [0], [1], [0, 0, 1, 1], [], []>} : vector<8x8xf32>, vector<8x256xf32>, vector<8x256xf32> -> vector<8x256xf32>
    %164 = arith.addf %162, %163 : vector<8x256xf32>
    %c255_i32_95 = arith.constant 255 : i32
    %165 = tpu.dynamic_rotate %135 by %c255_i32_95 dim 1 : vector<8x256xf32>, i32 -> vector<8x256xf32>
    %cst_96 = arith.constant 0.000000e+00 : f32
    %166 = vector.shape_cast %20 : vector<1x256xi1> to vector<1x256xi1>
    %167 = vector.broadcast %166 : vector<1x256xi1> to vector<8x256xi1>
    %168 = vector.broadcast %cst_96 : f32 to vector<8x256xf32>
    %169 = arith.select %167, %165, %168 : vector<8x256xi1>, vector<8x256xf32>
    %cst_97 = arith.constant dense<0.000000e+00> : vector<8x256xf32>
    %170 = tpu.matmul %62, %169, %cst_97 {dimension_numbers = #tpu.dot_dimension_numbers<[1], [0], [0], [1], [0, 0, 1, 1], [], []>} : vector<8x8xf32>, vector<8x256xf32>, vector<8x256xf32> -> vector<8x256xf32>
    %171 = arith.addf %164, %170 : vector<8x256xf32>
    %c241_i32_98 = arith.constant 241 : i32
    %172 = tpu.dynamic_rotate %135 by %c241_i32_98 dim 1 : vector<8x256xf32>, i32 -> vector<8x256xf32>
    %cst_99 = arith.constant 0.000000e+00 : f32
    %173 = vector.shape_cast %25 : vector<1x256xi1> to vector<1x256xi1>
    %174 = vector.broadcast %173 : vector<1x256xi1> to vector<8x256xi1>
    %175 = vector.broadcast %cst_99 : f32 to vector<8x256xf32>
    %176 = arith.select %174, %172, %175 : vector<8x256xi1>, vector<8x256xf32>
    %cst_100 = arith.constant dense<0.000000e+00> : vector<8x256xf32>
    %177 = tpu.matmul %64, %176, %cst_100 {dimension_numbers = #tpu.dot_dimension_numbers<[1], [0], [0], [1], [0, 0, 1, 1], [], []>} : vector<8x8xf32>, vector<8x256xf32>, vector<8x256xf32> -> vector<8x256xf32>
    %178 = arith.addf %171, %177 : vector<8x256xf32>
    %c240_i32_101 = arith.constant 240 : i32
    %179 = tpu.dynamic_rotate %135 by %c240_i32_101 dim 1 : vector<8x256xf32>, i32 -> vector<8x256xf32>
    %cst_102 = arith.constant 0.000000e+00 : f32
    %180 = vector.shape_cast %27 : vector<1x256xi1> to vector<1x256xi1>
    %181 = vector.broadcast %180 : vector<1x256xi1> to vector<8x256xi1>
    %182 = vector.broadcast %cst_102 : f32 to vector<8x256xf32>
    %183 = arith.select %181, %179, %182 : vector<8x256xi1>, vector<8x256xf32>
    %cst_103 = arith.constant dense<0.000000e+00> : vector<8x256xf32>
    %184 = tpu.matmul %66, %183, %cst_103 {dimension_numbers = #tpu.dot_dimension_numbers<[1], [0], [0], [1], [0, 0, 1, 1], [], []>} : vector<8x8xf32>, vector<8x256xf32>, vector<8x256xf32> -> vector<8x256xf32>
    %185 = arith.addf %178, %184 : vector<8x256xf32>
    %c239_i32_104 = arith.constant 239 : i32
    %186 = tpu.dynamic_rotate %135 by %c239_i32_104 dim 1 : vector<8x256xf32>, i32 -> vector<8x256xf32>
    %cst_105 = arith.constant 0.000000e+00 : f32
    %187 = vector.shape_cast %32 : vector<1x256xi1> to vector<1x256xi1>
    %188 = vector.broadcast %187 : vector<1x256xi1> to vector<8x256xi1>
    %189 = vector.broadcast %cst_105 : f32 to vector<8x256xf32>
    %190 = arith.select %188, %186, %189 : vector<8x256xi1>, vector<8x256xf32>
    %cst_106 = arith.constant dense<0.000000e+00> : vector<8x256xf32>
    %191 = tpu.matmul %68, %190, %cst_106 {dimension_numbers = #tpu.dot_dimension_numbers<[1], [0], [0], [1], [0, 0, 1, 1], [], []>} : vector<8x8xf32>, vector<8x256xf32>, vector<8x256xf32> -> vector<8x256xf32>
    %192 = arith.addf %185, %191 : vector<8x256xf32>
    %193 = arith.addf %192, %72 : vector<8x256xf32>
    %cst_107 = arith.constant 0.000000e+00 : f32
    %194 = vector.broadcast %cst_107 : f32 to vector<8x256xf32>
    %195 = arith.maximumf %193, %194 : vector<8x256xf32>
    %c0_108 = arith.constant 0 : index
    %c0_109 = arith.constant 0 : index
    %c0_110 = arith.constant 0 : index
    %196 = vector.load %arg6[%c0_108, %c0_109, %c0_110] : memref<1x8x256xf32, #tpu.memory_space<vmem>>, vector<1x8x256xf32>
    %197 = vector.shape_cast %196 : vector<1x8x256xf32> to vector<8x256xf32>
    %198 = vector.shape_cast %195 : vector<8x256xf32> to vector<1x8x256xf32>
    tpu.vector_store %arg6[%c0_108, %c0_109, %c0_110], %198 {strides = array<i32>} : memref<1x8x256xf32, #tpu.memory_space<vmem>>, vector<1x8x256xf32>,
    return
  }
  func.func @transform_0(%arg0: i32) -> (i32, i32, i32) {
    %c0_i32 = arith.constant 0 : i32
    %c0_i32_0 = arith.constant 0 : i32
    %c0_i32_1 = arith.constant 0 : i32
    return %arg0, %c0_i32, %c0_i32_0 : i32, i32, i32
  }
  func.func @transform_1(%arg0: i32) -> (i32, i32, i32) {
    %c0_i32 = arith.constant 0 : i32
    %c0_i32_0 = arith.constant 0 : i32
    %c0_i32_1 = arith.constant 0 : i32
    %c0_i32_2 = arith.constant 0 : i32
    return %c0_i32, %c0_i32_0, %c0_i32_1 : i32, i32, i32
  }
  func.func @transform_2(%arg0: i32) -> (i32, i32, i32) {
    %c0_i32 = arith.constant 0 : i32
    %c0_i32_0 = arith.constant 0 : i32
    %c0_i32_1 = arith.constant 0 : i32
    %c0_i32_2 = arith.constant 0 : i32
    return %c0_i32, %c0_i32_0, %c0_i32_1 : i32, i32, i32
  }
  func.func @transform_3(%arg0: i32) -> (i32, i32) {
    %c0_i32 = arith.constant 0 : i32
    %c0_i32_0 = arith.constant 0 : i32
    %c0_i32_1 = arith.constant 0 : i32
    return %c0_i32, %c0_i32_0 : i32, i32
  }
  func.func @transform_4(%arg0: i32) -> (i32, i32) {
    %c0_i32 = arith.constant 0 : i32
    %c0_i32_0 = arith.constant 0 : i32
    %c0_i32_1 = arith.constant 0 : i32
    return %c0_i32, %c0_i32_0 : i32, i32
  }
  func.func @transform_5(%arg0: i32) -> (i32, i32, i32) {
    %c0_i32 = arith.constant 0 : i32
    %c0_i32_0 = arith.constant 0 : i32
    %c0_i32_1 = arith.constant 0 : i32
    return %arg0, %c0_i32, %c0_i32_0 : i32, i32, i32
  }
}

</mosaic_0001>

<llo_original>
// kernel: tpu_custom_call.1
$region0: #{tpu_custom_call.1}
  #allocation0 [shape = 'u32[]', space=smem, size = 0x4, offset = 0x4, fixed_abs, tag = 'smem constant byte address 0x4 - core index']
  #allocation1 [shape = 'u32[144,128]{1,0:T(1,128)}', space=vmem, size = 0x12000, scoped, tag = 'internal scratch']
  %s0 = inlined_call_operand.vmem [shape: f32[2,8,256], index: 0, kind: input, shape index: {}]
  %s1 = inlined_call_operand.vmem [shape: f32[9,8,8], index: 1, kind: input, shape index: {}]
  %s2 = inlined_call_operand.vmem [shape: f32[9,8,8], index: 2, kind: input, shape index: {}]
  %s3 = inlined_call_operand.vmem [shape: f32[8,1], index: 3, kind: input, shape index: {}]
  %s4 = inlined_call_operand.vmem [shape: f32[8,1], index: 4, kind: input, shape index: {}]
  %s5 = inlined_call_operand.hbm [shape: f32[2,8,256], index: 5, kind: output, shape index: {}]
  %s6 = sld [smem:[#allocation0]]
  $region53: #{tpu_custom_call.1} parent=0
    _
  %s8 = ssub.s32 1, %s6
  %s9 = scalar_select 0, %s8, %s6
  $region1: #{tpu_custom_call.1} parent=0
    #allocation2 [shape = 'u8[16384]{0}', space=vmem, size = 0x4000, scoped, tag = 'output window, operand 0']
    #allocation3 [shape = 's32[2]{0}', space=sflag, size = 0x8, scoped, tag = 'scoped memory for tpu_custom_call.1']
    %10 = vsyncpa [#allocation3], 0
    %s11 = scalar_lea.sflag [#allocation3], 1
    %12 = vsyncpa %s11, 0
    loop: start=0, step=1, limit=4
    $region2: #{tpu_custom_call.1} parent=1 // loop_pre_header
      _
    $region3: #{tpu_custom_call.1} parent=1 // loop_header
      %s14 = sphi 0, %s18
      %p15 = scmp.ge.s32.totalorder %s14, 4
      %s24 = sphi 0, %s26
      %s27 = sphi 0, %s24
      %s28 = sphi 0, %s27
      %s44 = sphi 0, %s28
      %s48 = sphi 0, %s48
      %s50 = sphi 0, %s48
      %s51 = sphi 0, %s50
      %s65 = sphi 0, %s51
      %s69 = sphi 0, %s69
      %s71 = sphi 0, %s69
      %s72 = sphi 0, %s71
      %s86 = sphi 0, %s72
      %s90 = sphi 0, %s90
      %s92 = sphi 0, %s90
      %s93 = sphi 0, %s92
      %s107 = sphi 0, %s93
      %s111 = sphi 0, %s111
      %s113 = sphi 0, %s111
      %s114 = sphi 0, %s113
      %s128 = sphi 0, %s114
      %s134 = sphi 0, %s136
      %s137 = sphi 0, %s134
      %s138 = sphi 0, %s137
      %s154 = sphi 0, %s138
    $region4: #{tpu_custom_call.1} parent=1 // loop_header_branch
      %17 = sbr.rel (%p15) target = $region8
    $region5: #{tpu_custom_call.1} parent=1 // loop_body
      %s19 = ssub.s32 %s14, 1
      %s20 = ssub.s32 %s14, 2
      %s21 = sadd.s32 %s14, 1
      %s22 = ssub.s32 %s14, %s21
      %p23 = scmp.eq.s32.totalorder %s22, 0
      %s25 = sadd.s32 %s24, 1
      %s26 = scalar_select %p23, %s24, %s25
      %p29 = pneg %p23
      %p30 = scmp.eq.s32.totalorder %s14, 1
      %p31 = por %p29, %p30
      %p32 = scmp.ne.s32.totalorder %s24, %s27
      %p33 = scmp.eq.s32.totalorder %s14, 0
      %p34 = por %p32, %p33
      %p35 = scmp.ne.s32.totalorder %s24, %s27
      %p36 = scmp.eq.s32.totalorder %s19, 1
      %p37 = por %p35, %p36
      %p38 = scmp.ne.s32.totalorder %s27, %s28
      %p39 = scmp.eq.s32.totalorder %s19, 0
      %p40 = por %p38, %p39
      %p41 = scmp.ne.s32.totalorder %s27, %s28
      %p42 = scmp.eq.s32.totalorder %s20, 1
      %p43 = por %p41, %p42
      %p45 = scmp.ne.s32.totalorder %s28, %s44
      %p46 = scmp.eq.s32.totalorder %s20, 0
      %p47 = por %p45, %p46
      %s49 = sadd.s32 %s48, 1
      %p52 = scmp.eq.s32.totalorder %s14, 1
      %p53 = scmp.ne.s32.totalorder %s48, %s50
      %p54 = scmp.eq.s32.totalorder %s14, 0
      %p55 = por %p53, %p54
      %p56 = scmp.ne.s32.totalorder %s48, %s50
      %p57 = scmp.eq.s32.totalorder %s19, 1
      %p58 = por %p56, %p57
      %p59 = scmp.ne.s32.totalorder %s50, %s51
      %p60 = scmp.eq.s32.totalorder %s19, 0
      %p61 = por %p59, %p60
      %p62 = scmp.ne.s32.totalorder %s50, %s51
      %p63 = scmp.eq.s32.totalorder %s20, 1
      %p64 = por %p62, %p63
      %p66 = scmp.ne.s32.totalorder %s51, %s65
      %p67 = scmp.eq.s32.totalorder %s20, 0
      %p68 = por %p66, %p67
      %s70 = sadd.s32 %s69, 1
      %p73 = scmp.eq.s32.totalorder %s14, 1
      %p74 = scmp.ne.s32.totalorder %s69, %s71
      %p75 = scmp.eq.s32.totalorder %s14, 0
      %p76 = por %p74, %p75
      %p77 = scmp.ne.s32.totalorder %s69, %s71
      %p78 = scmp.eq.s32.totalorder %s19, 1
      %p79 = por %p77, %p78
      %p80 = scmp.ne.s32.totalorder %s71, %s72
      %p81 = scmp.eq.s32.totalorder %s19, 0
      %p82 = por %p80, %p81
      %p83 = scmp.ne.s32.totalorder %s71, %s72
      %p84 = scmp.eq.s32.totalorder %s20, 1
      %p85 = por %p83, %p84
      %p87 = scmp.ne.s32.totalorder %s72, %s86
      %p88 = scmp.eq.s32.totalorder %s20, 0
      %p89 = por %p87, %p88
      %s91 = sadd.s32 %s90, 1
      %p94 = scmp.eq.s32.totalorder %s14, 1
      %p95 = scmp.ne.s32.totalorder %s90, %s92
      %p96 = scmp.eq.s32.totalorder %s14, 0
      %p97 = por %p95, %p96
      %p98 = scmp.ne.s32.totalorder %s90, %s92
      %p99 = scmp.eq.s32.totalorder %s19, 1
      %p100 = por %p98, %p99
      %p101 = scmp.ne.s32.totalorder %s92, %s93
      %p102 = scmp.eq.s32.totalorder %s19, 0
      %p103 = por %p101, %p102
      %p104 = scmp.ne.s32.totalorder %s92, %s93
      %p105 = scmp.eq.s32.totalorder %s20, 1
      %p106 = por %p104, %p105
      %p108 = scmp.ne.s32.totalorder %s93, %s107
      %p109 = scmp.eq.s32.totalorder %s20, 0
      %p110 = por %p108, %p109
      %s112 = sadd.s32 %s111, 1
      %p115 = scmp.eq.s32.totalorder %s14, 1
      %p116 = scmp.ne.s32.totalorder %s111, %s113
      %p117 = scmp.eq.s32.totalorder %s14, 0
      %p118 = por %p116, %p117
      %p119 = scmp.ne.s32.totalorder %s111, %s113
      %p120 = scmp.eq.s32.totalorder %s19, 1
      %p121 = por %p119, %p120
      %p122 = scmp.ne.s32.totalorder %s113, %s114
      %p123 = scmp.eq.s32.totalorder %s19, 0
      %p124 = por %p122, %p123
      %p125 = scmp.ne.s32.totalorder %s113, %s114
      %p126 = scmp.eq.s32.totalorder %s20, 1
      %p127 = por %p125, %p126
      %p129 = scmp.ne.s32.totalorder %s114, %s128
      %p130 = scmp.eq.s32.totalorder %s20, 0
      %p131 = por %p129, %p130
      %s132 = ssub.s32 %s14, %s21
      %p133 = scmp.eq.s32.totalorder %s132, 0
      %s135 = sadd.s32 %s134, 1
      %s136 = scalar_select %p133, %s134, %s135
      %p139 = pneg %p133
      %p140 = scmp.eq.s32.totalorder %s14, 1
      %p141 = por %p139, %p140
      %p142 = scmp.ne.s32.totalorder %s134, %s137
      %p143 = scmp.eq.s32.totalorder %s14, 0
      %p144 = por %p142, %p143
      %p145 = scmp.ne.s32.totalorder %s134, %s137
      %p146 = scmp.eq.s32.totalorder %s19, 1
      %p147 = por %p145, %p146
      %p148 = scmp.ne.s32.totalorder %s137, %s138
      %p149 = scmp.eq.s32.totalorder %s19, 0
      %p150 = por %p148, %p149
      %p151 = scmp.ne.s32.totalorder %s137, %s138
      %p152 = scmp.eq.s32.totalorder %s20, 1
      %p153 = por %p151, %p152
      %p155 = scmp.ne.s32.totalorder %s138, %s154
      %p156 = scmp.eq.s32.totalorder %s20, 0
      %p157 = por %p155, %p156
      %p158 = scmp.le.s32.totalorder 1, %s14
      %p159 = scmp.lt.s32.totalorder %s14, 3
      %p160 = pnand %p158, %p159
      %p161 = pneg %p160
      // Predicated region
      $region9: #{tpu_custom_call.1} parent=5 // pred_check
        _
      $region10: #{tpu_custom_call.1} parent=5 // pred_check_branch
        %163 = sbr.rel (%p160) target = $region12
      $region11: #{tpu_custom_call.1} parent=5 // pred_region
        %s164 = ssub.s32 %s14, 1
        // Predicated region
        $region13: #{tpu_custom_call.1} parent=11 // pred_check
          %p165 = pneg %p61
        $region14: #{tpu_custom_call.1} parent=11 // pred_check_branch
          %167 = sbr.rel (%p165) target = $region16
        $region15: #{tpu_custom_call.1} parent=11 // pred_region
          _
        $region16: #{tpu_custom_call.1} parent=11 // pred_fallthru
          _
        // Predicated region
        $region17: #{tpu_custom_call.1} parent=11 // pred_check
          %p168 = pneg %p82
        $region18: #{tpu_custom_call.1} parent=11 // pred_check_branch
          %170 = sbr.rel (%p168) target = $region20
        $region19: #{tpu_custom_call.1} parent=11 // pred_region
          _
        $region20: #{tpu_custom_call.1} parent=11 // pred_fallthru
          _
        // Predicated region
        $region21: #{tpu_custom_call.1} parent=11 // pred_check
          %p171 = pneg %p103
        $region22: #{tpu_custom_call.1} parent=11 // pred_check_branch
          %173 = sbr.rel (%p171) target = $region24
        $region23: #{tpu_custom_call.1} parent=11 // pred_region
          _
        $region24: #{tpu_custom_call.1} parent=11 // pred_fallthru
          _
        // Predicated region
        $region25: #{tpu_custom_call.1} parent=11 // pred_check
          %p174 = pneg %p124
        $region26: #{tpu_custom_call.1} parent=11 // pred_check_branch
          %176 = sbr.rel (%p174) target = $region28
        $region27: #{tpu_custom_call.1} parent=11 // pred_region
          _
        $region28: #{tpu_custom_call.1} parent=11 // pred_fallthru
          _
      $region12: #{tpu_custom_call.1} parent=5 // pred_fallthru
        _
      %p177 = scmp.lt.s32.totalorder %s14, 2
      // Predicated region
      $region29: #{tpu_custom_call.1} parent=5 // pred_check
        %p178 = pneg %p177
      $region30: #{tpu_custom_call.1} parent=5 // pred_check_branch
        %180 = sbr.rel (%p178) target = $region32
      $region31: #{tpu_custom_call.1} parent=5 // pred_region
        // Predicated region
        $region33: #{tpu_custom_call.1} parent=31 // pred_check
          %p181 = pneg %p34
        $region34: #{tpu_custom_call.1} parent=31 // pred_check_branch
          %183 = sbr.rel (%p181) target = $region36
        $region35: #{tpu_custom_call.1} parent=31 // pred_region
          %p184 = scmp.lt.s32.totalorder %s14, 1
          %s185 = scalar_select %p184, %s14, 1
          %s186 = smul.addr %s185, 2
          %s187 = smul.addr %s186, 8
          %s188 = scalar_lea.vmem %s0, %s187
        $region36: #{tpu_custom_call.1} parent=31 // pred_fallthru
          _
      $region32: #{tpu_custom_call.1} parent=5 // pred_fallthru
        _
      %p189 = scmp.le.s32.totalorder 1, %s14
      %p190 = scmp.lt.s32.totalorder %s14, 3
      %p191 = pnand %p189, %p190
      %p192 = pneg %p191
      // Predicated region
      $region37: #{tpu_custom_call.1} parent=5 // pred_check
        _
      $region38: #{tpu_custom_call.1} parent=5 // pred_check_branch
        %194 = sbr.rel (%p191) target = $region40
      $region39: #{tpu_custom_call.1} parent=5 // pred_region
        %s195 = ssub.s32 %s14, 1
        %p196 = scmp.lt.s32.totalorder %s19, 1
        %s197 = scalar_select %p196, %s19, 1
        %s198 = smul.addr %s197, 2
        %s199 = smul.addr %s198, 8
        %s200 = scalar_lea.vmem %s0, %s199
        %p201 = pneg %p40
        %p202 = pneg %p37
        %p203 = pneg %p61
        %p204 = pneg %p58
        %p205 = pneg %p82
        %p206 = pneg %p79
        %p207 = pneg %p103
        %p208 = pneg %p100
        %p209 = pneg %p124
        %p210 = pneg %p121
        %p211 = pneg %p150
        %p212 = pneg %p147
        %s213 = sand.u32 %s137, 1
        %s214 = scalar_lea.sflag [#allocation3], %s213
        %s215 = sand.u32 %s137, 1
        %s216 = smul.addr %s215, 16
        %s217 = scalar_lea.vmem [#allocation2], %s216
        %p218 = scmp.lt.s32.totalorder %s19, 1
        %s219 = scalar_select %p218, %s19, 1
        %s220 = smul.addr %s219, 2
        %s221 = smul.addr %s220, 8
        %s222 = scalar_lea.vmem %s0, %s221
        %v223 = vlaneseq
        %v224 = vand.u32 %v223, 127
        %v225 = vadd.s32 %v224, 128
        %v226 = vshra.s32 %v224, 4
        %v227 = vshra.s32 %v225, 4
        %v228 = vand.u32 %v224, 15
        %v229 = vand.u32 %v225, 15
        %vm230 = vcmp.ge.s32.totalorder %v226, 1
        %vm231 = vcmp.ge.s32.totalorder %v227, 1
        %vm232 = vcmp.ge.s32.totalorder %v228, 1
        %vm233 = vcmp.ge.s32.totalorder %v229, 1
        %vm234 = vmand %vm230, %vm232
        %vm235 = vmand %vm231, %vm233
        %vm236 = vcmp.lt.s32.totalorder %v228, 15
        %vm237 = vcmp.lt.s32.totalorder %v229, 15
        %vm238 = vmand %vm230, %vm236
        %vm239 = vmand %vm231, %vm237
        %vm240 = vcmp.lt.s32.totalorder %v226, 15
        %vm241 = vcmp.lt.s32.totalorder %v227, 15
        %vm242 = vmand %vm240, %vm232
        %vm243 = vmand %vm241, %vm233
        %vm244 = vmand %vm240, %vm236
        %vm245 = vmand %vm241, %vm237
        %v246 = vld [vmem:[%s1] sm:$0xff]
        %s247 = scalar_lea.vmem %s1, 8
        %v248 = vld [vmem:[%s247] sm:$0xff]
        %s249 = scalar_lea.vmem %s1, 16
        %v250 = vld [vmem:[%s249] sm:$0xff]
        %s251 = scalar_lea.vmem %s1, 24
        %v252 = vld [vmem:[%s251] sm:$0xff]
        %s253 = scalar_lea.vmem %s1, 32
        %v254 = vld [vmem:[%s253] sm:$0xff]
        %s255 = scalar_lea.vmem %s1, 40
        %v256 = vld [vmem:[%s255] sm:$0xff]
        %s257 = scalar_lea.vmem %s1, 48
        %v258 = vld [vmem:[%s257] sm:$0xff]
        %s259 = scalar_lea.vmem %s1, 56
        %v260 = vld [vmem:[%s259] sm:$0xff]
        %s261 = scalar_lea.vmem %s1, 64
        %v262 = vld [vmem:[%s261] sm:$0xff]
        %v263 = vld [vmem:[%s2] sm:$0xff]
        %s264 = scalar_lea.vmem %s2, 8
        %v265 = vld [vmem:[%s264] sm:$0xff]
        %s266 = scalar_lea.vmem %s2, 16
        %v267 = vld [vmem:[%s266] sm:$0xff]
        %s268 = scalar_lea.vmem %s2, 24
        %v269 = vld [vmem:[%s268] sm:$0xff]
        %s270 = scalar_lea.vmem %s2, 32
        %v271 = vld [vmem:[%s270] sm:$0xff]
        %s272 = scalar_lea.vmem %s2, 40
        %v273 = vld [vmem:[%s272] sm:$0xff]
        %s274 = scalar_lea.vmem %s2, 48
        %v275 = vld [vmem:[%s274] sm:$0xff]
        %s276 = scalar_lea.vmem %s2, 56
        %v277 = vld [vmem:[%s276] sm:$0xff]
        %s278 = scalar_lea.vmem %s2, 64
        %v279 = vld [vmem:[%s278] sm:$0xff]
        %v280 = vld [vmem:[%s3] sm:$0xff]
        %v281 = vld [vmem:[%s4] sm:$0xff]
        %v282 = vld [vmem:[%s222] sm:$0xff]
        %v283 = vld [vmem:[%s222 + $0x8] sm:$0xff]
        %284 = vrot.lane.b32.xlu0 %v282, 17
        %v285 = vpop.permute.xlu0 %284
        %286 = vrot.lane.b32.xlu0 %v283, 17
        %v287 = vpop.permute.xlu0 %286
        %vm288 = vcmp.lt.s32.totalorder %v224, 17
        %v289 = vsel %vm288, %v285, %v287
        %v290 = vsel %vm288, %v287, %v285
        %v291 = vsel %vm234, 1, 0
        %v292 = vsel %vm235, 1, 0
        %vm293 = vcmp.eq.s32.totalorder %v291, 1
        %vm294 = vcmp.eq.s32.totalorder %v292, 1
        %v295 = vsel %vm293, %v290, 0.0
        %v296 = vsel %vm294, %v289, 0.0
        %297 = vrot.lane.b32.xlu0 %v282, 16
        %v298 = vpop.permute.xlu0 %297
        %299 = vrot.lane.b32.xlu0 %v283, 16
        %v300 = vpop.permute.xlu0 %299
        %vm301 = vcmp.lt.s32.totalorder %v224, 16
        %v302 = vsel %vm301, %v298, %v300
        %v303 = vsel %vm301, %v300, %v298
        %v304 = vsel %vm230, 1, 0
        %v305 = vsel %vm231, 1, 0
        %vm306 = vcmp.eq.s32.totalorder %v304, 1
        %vm307 = vcmp.eq.s32.totalorder %v305, 1
        %v308 = vsel %vm306, %v303, 0.0
        %v309 = vsel %vm307, %v302, 0.0
        %vm310 = vcmask 64512
        %v312 = vsel %vm310, %v248, 0
        %314 = vmatprep.subr.mxu0 0.0
        %315 = vmatpush1.msra.mxu0 0.0
        %316 = vmatprep.subr.mxu0 0.0
        %317 = vmatpush1.msra.mxu0 0.0
        %318 = vmatprep.subr.mxu0 0.0
        %319 = vmatpush1.msra.mxu0 0.0
        %320 = vmatprep.subr.mxu0 0.0
        %321 = vmatpush1.msra.mxu0 0.0
        %322 = vmatprep.subr.mxu0 0.0
        %323 = vmatpush1.msra.mxu0 0.0
        %324 = vmatprep.subr.mxu0 0.0
        %325 = vmatpush1.msra.mxu0 0.0
        %326 = vmatprep.subr.mxu0 0.0
        %327 = vmatpush1.msra.mxu0 0.0
        %328 = vmatprep.subr.mxu0 0.0
        %329 = vmatpush1.msra.mxu0 0.0
        %330 = vmatprep.subr.mxu0 0.0
        %331 = vmatpush1.msra.mxu0 0.0
        %332 = vmatprep.subr.mxu0 0.0
        %333 = vmatpush1.msra.mxu0 0.0
        %334 = vmatprep.subr.mxu0 0.0
        %335 = vmatpush1.msra.mxu0 0.0
        %336 = vmatprep.subr.mxu0 0.0
        %337 = vmatpush1.msra.mxu0 0.0
        %338 = vmatprep.subr.mxu0 0.0
        %339 = vmatpush1.msra.mxu0 0.0
        %340 = vmatprep.subr.mxu0 0.0
        %341 = vmatpush1.msra.mxu0 0.0
        %342 = vmatprep.subr.mxu0 0.0
        %343 = vmatpush1.msra.mxu0 0.0
        %344 = vmatprep.subr.mxu0 %v309
        %345 = vmatpush1.msra.mxu0 %v308
        %346 = vmatprep.subr.mxu0 0.0
        %347 = vmatpush2.msra.mxu0 0.0
        %348 = vmatprep.subr.mxu0 0.0
        %349 = vmatpush2.msra.mxu0 0.0
        %350 = vmatprep.subr.mxu0 0.0
        %351 = vmatpush2.msra.mxu0 0.0
        %352 = vmatprep.subr.mxu0 0.0
        %353 = vmatpush2.msra.mxu0 0.0
        %354 = vmatprep.subr.mxu0 0.0
        %355 = vmatpush2.msra.mxu0 0.0
        %356 = vmatprep.subr.mxu0 0.0
        %357 = vmatpush2.msra.mxu0 0.0
        %358 = vmatprep.subr.mxu0 0.0
        %359 = vmatpush2.msra.mxu0 0.0
        %360 = vmatprep.subr.mxu0 0.0
        %361 = vmatpush2.msra.mxu0 0.0
        %362 = vmatprep.subr.mxu0 0.0
        %363 = vmatpush2.msra.mxu0 0.0
        %364 = vmatprep.subr.mxu0 0.0
        %365 = vmatpush2.msra.mxu0 0.0
        %366 = vmatprep.subr.mxu0 0.0
        %367 = vmatpush2.msra.mxu0 0.0
        %368 = vmatprep.subr.mxu0 0.0
        %369 = vmatpush2.msra.mxu0 0.0
        %370 = vmatprep.subr.mxu0 0.0
        %371 = vmatpush2.msra.mxu0 0.0
        %372 = vmatprep.subr.mxu0 0.0
        %373 = vmatpush2.msra.mxu0 0.0
        %374 = vmatprep.subr.mxu0 0.0
        %375 = vmatpush2.msra.mxu0 0.0
        %376 = vmatprep.subr.mxu0 0.0
        %377 = vmatpush2.msra.mxu0 0.0
        %378 = vmatprep.mubr.f32.mxu0 0.0
        %379 = vmatmul.mubr.f32.gmra.mxu0 %v312
        %v380 = vpop.f32.mrf.mxu0
        %v381 = vadd.f32 0.0, %v380
        %v382 = vpop.f32.mrf.mxu0
        %v383 = vadd.f32 0.0, %v382
        %384 = vdwg.mxu0
        %v386 = vsel %vm310, %v246, 0
        %388 = vmatprep.subr.mxu0 0.0
        %389 = vmatpush1.msra.mxu0 0.0
        %390 = vmatprep.subr.mxu0 0.0
        %391 = vmatpush1.msra.mxu0 0.0
        %392 = vmatprep.subr.mxu0 0.0
        %393 = vmatpush1.msra.mxu0 0.0
        %394 = vmatprep.subr.mxu0 0.0
        %395 = vmatpush1.msra.mxu0 0.0
        %396 = vmatprep.subr.mxu0 0.0
        %397 = vmatpush1.msra.mxu0 0.0
        %398 = vmatprep.subr.mxu0 0.0
        %399 = vmatpush1.msra.mxu0 0.0
        %400 = vmatprep.subr.mxu0 0.0
        %401 = vmatpush1.msra.mxu0 0.0
        %402 = vmatprep.subr.mxu0 0.0
        %403 = vmatpush1.msra.mxu0 0.0
        %404 = vmatprep.subr.mxu0 0.0
        %405 = vmatpush1.msra.mxu0 0.0
        %406 = vmatprep.subr.mxu0 0.0
        %407 = vmatpush1.msra.mxu0 0.0
        %408 = vmatprep.subr.mxu0 0.0
        %409 = vmatpush1.msra.mxu0 0.0
        %410 = vmatprep.subr.mxu0 0.0
        %411 = vmatpush1.msra.mxu0 0.0
        %412 = vmatprep.subr.mxu0 0.0
        %413 = vmatpush1.msra.mxu0 0.0
        %414 = vmatprep.subr.mxu0 0.0
        %415 = vmatpush1.msra.mxu0 0.0
        %416 = vmatprep.subr.mxu0 0.0
        %417 = vmatpush1.msra.mxu0 0.0
        %418 = vmatprep.subr.mxu0 %v296
        %419 = vmatpush1.msra.mxu0 %v295
        %420 = vmatprep.subr.mxu0 0.0
        %421 = vmatpush2.msra.mxu0 0.0
        %422 = vmatprep.subr.mxu0 0.0
        %423 = vmatpush2.msra.mxu0 0.0
        %424 = vmatprep.subr.mxu0 0.0
        %425 = vmatpush2.msra.mxu0 0.0
        %426 = vmatprep.subr.mxu0 0.0
        %427 = vmatpush2.msra.mxu0 0.0
        %428 = vmatprep.subr.mxu0 0.0
        %429 = vmatpush2.msra.mxu0 0.0
        %430 = vmatprep.subr.mxu0 0.0
        %431 = vmatpush2.msra.mxu0 0.0
        %432 = vmatprep.subr.mxu0 0.0
        %433 = vmatpush2.msra.mxu0 0.0
        %434 = vmatprep.subr.mxu0 0.0
        %435 = vmatpush2.msra.mxu0 0.0
        %436 = vmatprep.subr.mxu0 0.0
        %437 = vmatpush2.msra.mxu0 0.0
        %438 = vmatprep.subr.mxu0 0.0
        %439 = vmatpush2.msra.mxu0 0.0
        %440 = vmatprep.subr.mxu0 0.0
        %441 = vmatpush2.msra.mxu0 0.0
        %442 = vmatprep.subr.mxu0 0.0
        %443 = vmatpush2.msra.mxu0 0.0
        %444 = vmatprep.subr.mxu0 0.0
        %445 = vmatpush2.msra.mxu0 0.0
        %446 = vmatprep.subr.mxu0 0.0
        %447 = vmatpush2.msra.mxu0 0.0
        %448 = vmatprep.subr.mxu0 0.0
        %449 = vmatpush2.msra.mxu0 0.0
        %450 = vmatprep.subr.mxu0 0.0
        %451 = vmatpush2.msra.mxu0 0.0
        %452 = vmatprep.mubr.f32.mxu0 0.0
        %453 = vmatmul.mubr.f32.gmra.mxu0 %v386
        %v454 = vpop.f32.mrf.mxu0
        %v455 = vadd.f32 %v381, %v454
        %v456 = vpop.f32.mrf.mxu0
        %v457 = vadd.f32 %v383, %v456
        %458 = vdwg.mxu0
        %459 = vrot.lane.b32.xlu0 %v282, 15
        %v460 = vpop.permute.xlu0 %459
        %461 = vrot.lane.b32.xlu0 %v283, 15
        %v462 = vpop.permute.xlu0 %461
        %vm463 = vcmp.lt.s32.totalorder %v224, 15
        %v464 = vsel %vm463, %v460, %v462
        %v465 = vsel %vm463, %v462, %v460
        %v466 = vsel %vm238, 1, 0
        %v467 = vsel %vm239, 1, 0
        %vm468 = vcmp.eq.s32.totalorder %v466, 1
        %vm469 = vcmp.eq.s32.totalorder %v467, 1
        %v470 = vsel %vm468, %v465, 0.0
        %v471 = vsel %vm469, %v464, 0.0
        %v473 = vsel %vm310, %v250, 0
        %475 = vmatprep.subr.mxu0 0.0
        %476 = vmatpush1.msra.mxu0 0.0
        %477 = vmatprep.subr.mxu0 0.0
        %478 = vmatpush1.msra.mxu0 0.0
        %479 = vmatprep.subr.mxu0 0.0
        %480 = vmatpush1.msra.mxu0 0.0
        %481 = vmatprep.subr.mxu0 0.0
        %482 = vmatpush1.msra.mxu0 0.0
        %483 = vmatprep.subr.mxu0 0.0
        %484 = vmatpush1.msra.mxu0 0.0
        %485 = vmatprep.subr.mxu0 0.0
        %486 = vmatpush1.msra.mxu0 0.0
        %487 = vmatprep.subr.mxu0 0.0
        %488 = vmatpush1.msra.mxu0 0.0
        %489 = vmatprep.subr.mxu0 0.0
        %490 = vmatpush1.msra.mxu0 0.0
        %491 = vmatprep.subr.mxu0 0.0
        %492 = vmatpush1.msra.mxu0 0.0
        %493 = vmatprep.subr.mxu0 0.0
        %494 = vmatpush1.msra.mxu0 0.0
        %495 = vmatprep.subr.mxu0 0.0
        %496 = vmatpush1.msra.mxu0 0.0
        %497 = vmatprep.subr.mxu0 0.0
        %498 = vmatpush1.msra.mxu0 0.0
        %499 = vmatprep.subr.mxu0 0.0
        %500 = vmatpush1.msra.mxu0 0.0
        %501 = vmatprep.subr.mxu0 0.0
        %502 = vmatpush1.msra.mxu0 0.0
        %503 = vmatprep.subr.mxu0 0.0
        %504 = vmatpush1.msra.mxu0 0.0
        %505 = vmatprep.subr.mxu0 %v471
        %506 = vmatpush1.msra.mxu0 %v470
        %507 = vmatprep.subr.mxu0 0.0
        %508 = vmatpush2.msra.mxu0 0.0
        %509 = vmatprep.subr.mxu0 0.0
        %510 = vmatpush2.msra.mxu0 0.0
        %511 = vmatprep.subr.mxu0 0.0
        %512 = vmatpush2.msra.mxu0 0.0
        %513 = vmatprep.subr.mxu0 0.0
        %514 = vmatpush2.msra.mxu0 0.0
        %515 = vmatprep.subr.mxu0 0.0
        %516 = vmatpush2.msra.mxu0 0.0
        %517 = vmatprep.subr.mxu0 0.0
        %518 = vmatpush2.msra.mxu0 0.0
        %519 = vmatprep.subr.mxu0 0.0
        %520 = vmatpush2.msra.mxu0 0.0
        %521 = vmatprep.subr.mxu0 0.0
        %522 = vmatpush2.msra.mxu0 0.0
        %523 = vmatprep.subr.mxu0 0.0
        %524 = vmatpush2.msra.mxu0 0.0
        %525 = vmatprep.subr.mxu0 0.0
        %526 = vmatpush2.msra.mxu0 0.0
        %527 = vmatprep.subr.mxu0 0.0
        %528 = vmatpush2.msra.mxu0 0.0
        %529 = vmatprep.subr.mxu0 0.0
        %530 = vmatpush2.msra.mxu0 0.0
        %531 = vmatprep.subr.mxu0 0.0
        %532 = vmatpush2.msra.mxu0 0.0
        %533 = vmatprep.subr.mxu0 0.0
        %534 = vmatpush2.msra.mxu0 0.0
        %535 = vmatprep.subr.mxu0 0.0
        %536 = vmatpush2.msra.mxu0 0.0
        %537 = vmatprep.subr.mxu0 0.0
        %538 = vmatpush2.msra.mxu0 0.0
        %539 = vmatprep.mubr.f32.mxu0 0.0
        %540 = vmatmul.mubr.f32.gmra.mxu0 %v473
        %v541 = vpop.f32.mrf.mxu0
        %v542 = vadd.f32 0.0, %v541
        %v543 = vpop.f32.mrf.mxu0
        %v544 = vadd.f32 0.0, %v543
        %545 = vdwg.mxu0
        %v546 = vadd.f32 %v455, %v542
        %v547 = vadd.f32 %v457, %v544
        %548 = vrot.lane.b32.xlu0 %v282, 1
        %v549 = vpop.permute.xlu0 %548
        %550 = vrot.lane.b32.xlu0 %v283, 1
        %v551 = vpop.permute.xlu0 %550
        %vm552 = vcmp.lt.s32.totalorder %v224, 1
        %v553 = vsel %vm552, %v549, %v551
        %v554 = vsel %vm552, %v551, %v549
        %v555 = vsel %vm232, 1, 0
        %v556 = vsel %vm233, 1, 0
        %vm557 = vcmp.eq.s32.totalorder %v555, 1
        %vm558 = vcmp.eq.s32.totalorder %v556, 1
        %v559 = vsel %vm557, %v554, 0.0
        %v560 = vsel %vm558, %v553, 0.0
        %v562 = vsel %vm310, %v252, 0
        %564 = vmatprep.subr.mxu0 0.0
        %565 = vmatpush1.msra.mxu0 0.0
        %566 = vmatprep.subr.mxu0 0.0
        %567 = vmatpush1.msra.mxu0 0.0
        %568 = vmatprep.subr.mxu0 0.0
        %569 = vmatpush1.msra.mxu0 0.0
        %570 = vmatprep.subr.mxu0 0.0
        %571 = vmatpush1.msra.mxu0 0.0
        %572 = vmatprep.subr.mxu0 0.0
        %573 = vmatpush1.msra.mxu0 0.0
        %574 = vmatprep.subr.mxu0 0.0
        %575 = vmatpush1.msra.mxu0 0.0
        %576 = vmatprep.subr.mxu0 0.0
        %577 = vmatpush1.msra.mxu0 0.0
        %578 = vmatprep.subr.mxu0 0.0
        %579 = vmatpush1.msra.mxu0 0.0
        %580 = vmatprep.subr.mxu0 0.0
        %581 = vmatpush1.msra.mxu0 0.0
        %582 = vmatprep.subr.mxu0 0.0
        %583 = vmatpush1.msra.mxu0 0.0
        %584 = vmatprep.subr.mxu0 0.0
        %585 = vmatpush1.msra.mxu0 0.0
        %586 = vmatprep.subr.mxu0 0.0
        %587 = vmatpush1.msra.mxu0 0.0
        %588 = vmatprep.subr.mxu0 0.0
        %589 = vmatpush1.msra.mxu0 0.0
        %590 = vmatprep.subr.mxu0 0.0
        %591 = vmatpush1.msra.mxu0 0.0
        %592 = vmatprep.subr.mxu0 0.0
        %593 = vmatpush1.msra.mxu0 0.0
        %594 = vmatprep.subr.mxu0 %v560
        %595 = vmatpush1.msra.mxu0 %v559
        %596 = vmatprep.subr.mxu0 0.0
        %597 = vmatpush2.msra.mxu0 0.0
        %598 = vmatprep.subr.mxu0 0.0
        %599 = vmatpush2.msra.mxu0 0.0
        %600 = vmatprep.subr.mxu0 0.0
        %601 = vmatpush2.msra.mxu0 0.0
        %602 = vmatprep.subr.mxu0 0.0
        %603 = vmatpush2.msra.mxu0 0.0
        %604 = vmatprep.subr.mxu0 0.0
        %605 = vmatpush2.msra.mxu0 0.0
        %606 = vmatprep.subr.mxu0 0.0
        %607 = vmatpush2.msra.mxu0 0.0
        %608 = vmatprep.subr.mxu0 0.0
        %609 = vmatpush2.msra.mxu0 0.0
        %610 = vmatprep.subr.mxu0 0.0
        %611 = vmatpush2.msra.mxu0 0.0
        %612 = vmatprep.subr.mxu0 0.0
        %613 = vmatpush2.msra.mxu0 0.0
        %614 = vmatprep.subr.mxu0 0.0
        %615 = vmatpush2.msra.mxu0 0.0
        %616 = vmatprep.subr.mxu0 0.0
        %617 = vmatpush2.msra.mxu0 0.0
        %618 = vmatprep.subr.mxu0 0.0
        %619 = vmatpush2.msra.mxu0 0.0
        %620 = vmatprep.subr.mxu0 0.0
        %621 = vmatpush2.msra.mxu0 0.0
        %622 = vmatprep.subr.mxu0 0.0
        %623 = vmatpush2.msra.mxu0 0.0
        %624 = vmatprep.subr.mxu0 0.0
        %625 = vmatpush2.msra.mxu0 0.0
        %626 = vmatprep.subr.mxu0 0.0
        %627 = vmatpush2.msra.mxu0 0.0
        %628 = vmatprep.mubr.f32.mxu0 0.0
        %629 = vmatmul.mubr.f32.gmra.mxu0 %v562
        %v630 = vpop.f32.mrf.mxu0
        %v631 = vadd.f32 0.0, %v630
        %v632 = vpop.f32.mrf.mxu0
        %v633 = vadd.f32 0.0, %v632
        %634 = vdwg.mxu0
        %v635 = vadd.f32 %v546, %v631
        %v636 = vadd.f32 %v547, %v633
        %v638 = vsel %vm310, %v254, 0
        %640 = vmatprep.subr.mxu0 0.0
        %641 = vmatpush1.msra.mxu0 0.0
        %642 = vmatprep.subr.mxu0 0.0
        %643 = vmatpush1.msra.mxu0 0.0
        %644 = vmatprep.subr.mxu0 0.0
        %645 = vmatpush1.msra.mxu0 0.0
        %646 = vmatprep.subr.mxu0 0.0
        %647 = vmatpush1.msra.mxu0 0.0
        %648 = vmatprep.subr.mxu0 0.0
        %649 = vmatpush1.msra.mxu0 0.0
        %650 = vmatprep.subr.mxu0 0.0
        %651 = vmatpush1.msra.mxu0 0.0
        %652 = vmatprep.subr.mxu0 0.0
        %653 = vmatpush1.msra.mxu0 0.0
        %654 = vmatprep.subr.mxu0 0.0
        %655 = vmatpush1.msra.mxu0 0.0
        %656 = vmatprep.subr.mxu0 0.0
        %657 = vmatpush1.msra.mxu0 0.0
        %658 = vmatprep.subr.mxu0 0.0
        %659 = vmatpush1.msra.mxu0 0.0
        %660 = vmatprep.subr.mxu0 0.0
        %661 = vmatpush1.msra.mxu0 0.0
        %662 = vmatprep.subr.mxu0 0.0
        %663 = vmatpush1.msra.mxu0 0.0
        %664 = vmatprep.subr.mxu0 0.0
        %665 = vmatpush1.msra.mxu0 0.0
        %666 = vmatprep.subr.mxu0 0.0
        %667 = vmatpush1.msra.mxu0 0.0
        %668 = vmatprep.subr.mxu0 0.0
        %669 = vmatpush1.msra.mxu0 0.0
        %670 = vmatprep.subr.mxu0 %v283
        %671 = vmatpush1.msra.mxu0 %v282
        %672 = vmatprep.subr.mxu0 0.0
        %673 = vmatpush2.msra.mxu0 0.0
        %674 = vmatprep.subr.mxu0 0.0
        %675 = vmatpush2.msra.mxu0 0.0
        %676 = vmatprep.subr.mxu0 0.0
        %677 = vmatpush2.msra.mxu0 0.0
        %678 = vmatprep.subr.mxu0 0.0
        %679 = vmatpush2.msra.mxu0 0.0
        %680 = vmatprep.subr.mxu0 0.0
        %681 = vmatpush2.msra.mxu0 0.0
        %682 = vmatprep.subr.mxu0 0.0
        %683 = vmatpush2.msra.mxu0 0.0
        %684 = vmatprep.subr.mxu0 0.0
        %685 = vmatpush2.msra.mxu0 0.0
        %686 = vmatprep.subr.mxu0 0.0
        %687 = vmatpush2.msra.mxu0 0.0
        %688 = vmatprep.subr.mxu0 0.0
        %689 = vmatpush2.msra.mxu0 0.0
        %690 = vmatprep.subr.mxu0 0.0
        %691 = vmatpush2.msra.mxu0 0.0
        %692 = vmatprep.subr.mxu0 0.0
        %693 = vmatpush2.msra.mxu0 0.0
        %694 = vmatprep.subr.mxu0 0.0
        %695 = vmatpush2.msra.mxu0 0.0
        %696 = vmatprep.subr.mxu0 0.0
        %697 = vmatpush2.msra.mxu0 0.0
        %698 = vmatprep.subr.mxu0 0.0
        %699 = vmatpush2.msra.mxu0 0.0
        %700 = vmatprep.subr.mxu0 0.0
        %701 = vmatpush2.msra.mxu0 0.0
        %702 = vmatprep.subr.mxu0 0.0
        %703 = vmatpush2.msra.mxu0 0.0
        %704 = vmatprep.mubr.f32.mxu0 0.0
        %705 = vmatmul.mubr.f32.gmra.mxu0 %v638
        %v706 = vpop.f32.mrf.mxu0
        %v707 = vadd.f32 0.0, %v706
        %v708 = vpop.f32.mrf.mxu0
        %v709 = vadd.f32 0.0, %v708
        %710 = vdwg.mxu0
        %v711 = vadd.f32 %v635, %v707
        %v712 = vadd.f32 %v636, %v709
        %713 = vrot.lane.b32.xlu0 %v282, 127
        %v714 = vpop.permute.xlu0 %713
        %715 = vrot.lane.b32.xlu0 %v283, 127
        %v716 = vpop.permute.xlu0 %715
        %vm717 = vcmp.lt.s32.totalorder %v224, 127
        %v718 = vsel %vm717, %v714, %v716
        %v719 = vsel %vm717, %v716, %v714
        %v720 = vsel %vm236, 1, 0
        %v721 = vsel %vm237, 1, 0
        %vm722 = vcmp.eq.s32.totalorder %v720, 1
        %vm723 = vcmp.eq.s32.totalorder %v721, 1
        %v724 = vsel %vm722, %v718, 0.0
        %v725 = vsel %vm723, %v719, 0.0
        %v727 = vsel %vm310, %v256, 0
        %729 = vmatprep.subr.mxu0 0.0
        %730 = vmatpush1.msra.mxu0 0.0
        %731 = vmatprep.subr.mxu0 0.0
        %732 = vmatpush1.msra.mxu0 0.0
        %733 = vmatprep.subr.mxu0 0.0
        %734 = vmatpush1.msra.mxu0 0.0
        %735 = vmatprep.subr.mxu0 0.0
        %736 = vmatpush1.msra.mxu0 0.0
        %737 = vmatprep.subr.mxu0 0.0
        %738 = vmatpush1.msra.mxu0 0.0
        %739 = vmatprep.subr.mxu0 0.0
        %740 = vmatpush1.msra.mxu0 0.0
        %741 = vmatprep.subr.mxu0 0.0
        %742 = vmatpush1.msra.mxu0 0.0
        %743 = vmatprep.subr.mxu0 0.0
        %744 = vmatpush1.msra.mxu0 0.0
        %745 = vmatprep.subr.mxu0 0.0
        %746 = vmatpush1.msra.mxu0 0.0
        %747 = vmatprep.subr.mxu0 0.0
        %748 = vmatpush1.msra.mxu0 0.0
        %749 = vmatprep.subr.mxu0 0.0
        %750 = vmatpush1.msra.mxu0 0.0
        %751 = vmatprep.subr.mxu0 0.0
        %752 = vmatpush1.msra.mxu0 0.0
        %753 = vmatprep.subr.mxu0 0.0
        %754 = vmatpush1.msra.mxu0 0.0
        %755 = vmatprep.subr.mxu0 0.0
        %756 = vmatpush1.msra.mxu0 0.0
        %757 = vmatprep.subr.mxu0 0.0
        %758 = vmatpush1.msra.mxu0 0.0
        %759 = vmatprep.subr.mxu0 %v725
        %760 = vmatpush1.msra.mxu0 %v724
        %761 = vmatprep.subr.mxu0 0.0
        %762 = vmatpush2.msra.mxu0 0.0
        %763 = vmatprep.subr.mxu0 0.0
        %764 = vmatpush2.msra.mxu0 0.0
        %765 = vmatprep.subr.mxu0 0.0
        %766 = vmatpush2.msra.mxu0 0.0
        %767 = vmatprep.subr.mxu0 0.0
        %768 = vmatpush2.msra.mxu0 0.0
        %769 = vmatprep.subr.mxu0 0.0
        %770 = vmatpush2.msra.mxu0 0.0
        %771 = vmatprep.subr.mxu0 0.0
        %772 = vmatpush2.msra.mxu0 0.0
        %773 = vmatprep.subr.mxu0 0.0
        %774 = vmatpush2.msra.mxu0 0.0
        %775 = vmatprep.subr.mxu0 0.0
        %776 = vmatpush2.msra.mxu0 0.0
        %777 = vmatprep.subr.mxu0 0.0
        %778 = vmatpush2.msra.mxu0 0.0
        %779 = vmatprep.subr.mxu0 0.0
        %780 = vmatpush2.msra.mxu0 0.0
        %781 = vmatprep.subr.mxu0 0.0
        %782 = vmatpush2.msra.mxu0 0.0
        %783 = vmatprep.subr.mxu0 0.0
        %784 = vmatpush2.msra.mxu0 0.0
        %785 = vmatprep.subr.mxu0 0.0
        %786 = vmatpush2.msra.mxu0 0.0
        %787 = vmatprep.subr.mxu0 0.0
        %788 = vmatpush2.msra.mxu0 0.0
        %789 = vmatprep.subr.mxu0 0.0
        %790 = vmatpush2.msra.mxu0 0.0
        %791 = vmatprep.subr.mxu0 0.0
        %792 = vmatpush2.msra.mxu0 0.0
        %793 = vmatprep.mubr.f32.mxu0 0.0
        %794 = vmatmul.mubr.f32.gmra.mxu0 %v727
        %v795 = vpop.f32.mrf.mxu0
        %v796 = vadd.f32 0.0, %v795
        %v797 = vpop.f32.mrf.mxu0
        %v798 = vadd.f32 0.0, %v797
        %799 = vdwg.mxu0
        %v800 = vadd.f32 %v711, %v796
        %v801 = vadd.f32 %v712, %v798
        %802 = vrot.lane.b32.xlu0 %v282, 113
        %v803 = vpop.permute.xlu0 %802
        %804 = vrot.lane.b32.xlu0 %v283, 113
        %v805 = vpop.permute.xlu0 %804
        %vm806 = vcmp.lt.s32.totalorder %v224, 113
        %v807 = vsel %vm806, %v803, %v805
        %v808 = vsel %vm806, %v805, %v803
        %v809 = vsel %vm242, 1, 0
        %v810 = vsel %vm243, 1, 0
        %vm811 = vcmp.eq.s32.totalorder %v809, 1
        %vm812 = vcmp.eq.s32.totalorder %v810, 1
        %v813 = vsel %vm811, %v807, 0.0
        %v814 = vsel %vm812, %v808, 0.0
        %v816 = vsel %vm310, %v258, 0
        %818 = vmatprep.subr.mxu0 0.0
        %819 = vmatpush1.msra.mxu0 0.0
        %820 = vmatprep.subr.mxu0 0.0
        %821 = vmatpush1.msra.mxu0 0.0
        %822 = vmatprep.subr.mxu0 0.0
        %823 = vmatpush1.msra.mxu0 0.0
        %824 = vmatprep.subr.mxu0 0.0
        %825 = vmatpush1.msra.mxu0 0.0
        %826 = vmatprep.subr.mxu0 0.0
        %827 = vmatpush1.msra.mxu0 0.0
        %828 = vmatprep.subr.mxu0 0.0
        %829 = vmatpush1.msra.mxu0 0.0
        %830 = vmatprep.subr.mxu0 0.0
        %831 = vmatpush1.msra.mxu0 0.0
        %832 = vmatprep.subr.mxu0 0.0
        %833 = vmatpush1.msra.mxu0 0.0
        %834 = vmatprep.subr.mxu0 0.0
        %835 = vmatpush1.msra.mxu0 0.0
        %836 = vmatprep.subr.mxu0 0.0
        %837 = vmatpush1.msra.mxu0 0.0
        %838 = vmatprep.subr.mxu0 0.0
        %839 = vmatpush1.msra.mxu0 0.0
        %840 = vmatprep.subr.mxu0 0.0
        %841 = vmatpush1.msra.mxu0 0.0
        %842 = vmatprep.subr.mxu0 0.0
        %843 = vmatpush1.msra.mxu0 0.0
        %844 = vmatprep.subr.mxu0 0.0
        %845 = vmatpush1.msra.mxu0 0.0
        %846 = vmatprep.subr.mxu0 0.0
        %847 = vmatpush1.msra.mxu0 0.0
        %848 = vmatprep.subr.mxu0 %v814
        %849 = vmatpush1.msra.mxu0 %v813
        %850 = vmatprep.subr.mxu0 0.0
        %851 = vmatpush2.msra.mxu0 0.0
        %852 = vmatprep.subr.mxu0 0.0
        %853 = vmatpush2.msra.mxu0 0.0
        %854 = vmatprep.subr.mxu0 0.0
        %855 = vmatpush2.msra.mxu0 0.0
        %856 = vmatprep.subr.mxu0 0.0
        %857 = vmatpush2.msra.mxu0 0.0
        %858 = vmatprep.subr.mxu0 0.0
        %859 = vmatpush2.msra.mxu0 0.0
        %860 = vmatprep.subr.mxu0 0.0
        %861 = vmatpush2.msra.mxu0 0.0
        %862 = vmatprep.subr.mxu0 0.0
        %863 = vmatpush2.msra.mxu0 0.0
        %864 = vmatprep.subr.mxu0 0.0
        %865 = vmatpush2.msra.mxu0 0.0
        %866 = vmatprep.subr.mxu0 0.0
        %867 = vmatpush2.msra.mxu0 0.0
        %868 = vmatprep.subr.mxu0 0.0
        %869 = vmatpush2.msra.mxu0 0.0
        %870 = vmatprep.subr.mxu0 0.0
        %871 = vmatpush2.msra.mxu0 0.0
        %872 = vmatprep.subr.mxu0 0.0
        %873 = vmatpush2.msra.mxu0 0.0
        %874 = vmatprep.subr.mxu0 0.0
        %875 = vmatpush2.msra.mxu0 0.0
        %876 = vmatprep.subr.mxu0 0.0
        %877 = vmatpush2.msra.mxu0 0.0
        %878 = vmatprep.subr.mxu0 0.0
        %879 = vmatpush2.msra.mxu0 0.0
        %880 = vmatprep.subr.mxu0 0.0
        %881 = vmatpush2.msra.mxu0 0.0
        %882 = vmatprep.mubr.f32.mxu0 0.0
        %883 = vmatmul.mubr.f32.gmra.mxu0 %v816
        %v884 = vpop.f32.mrf.mxu0
        %v885 = vadd.f32 0.0, %v884
        %v886 = vpop.f32.mrf.mxu0
        %v887 = vadd.f32 0.0, %v886
        %888 = vdwg.mxu0
        %v889 = vadd.f32 %v800, %v885
        %v890 = vadd.f32 %v801, %v887
        %891 = vrot.lane.b32.xlu0 %v282, 112
        %v892 = vpop.permute.xlu0 %891
        %893 = vrot.lane.b32.xlu0 %v283, 112
        %v894 = vpop.permute.xlu0 %893
        %vm895 = vcmp.lt.s32.totalorder %v224, 112
        %v896 = vsel %vm895, %v892, %v894
        %v897 = vsel %vm895, %v894, %v892
        %v898 = vsel %vm240, 1, 0
        %v899 = vsel %vm241, 1, 0
        %vm900 = vcmp.eq.s32.totalorder %v898, 1
        %vm901 = vcmp.eq.s32.totalorder %v899, 1
        %v902 = vsel %vm900, %v896, 0.0
        %v903 = vsel %vm901, %v897, 0.0
        %v905 = vsel %vm310, %v260, 0
        %907 = vmatprep.subr.mxu0 0.0
        %908 = vmatpush1.msra.mxu0 0.0
        %909 = vmatprep.subr.mxu0 0.0
        %910 = vmatpush1.msra.mxu0 0.0
        %911 = vmatprep.subr.mxu0 0.0
        %912 = vmatpush1.msra.mxu0 0.0
        %913 = vmatprep.subr.mxu0 0.0
        %914 = vmatpush1.msra.mxu0 0.0
        %915 = vmatprep.subr.mxu0 0.0
        %916 = vmatpush1.msra.mxu0 0.0
        %917 = vmatprep.subr.mxu0 0.0
        %918 = vmatpush1.msra.mxu0 0.0
        %919 = vmatprep.subr.mxu0 0.0
        %920 = vmatpush1.msra.mxu0 0.0
        %921 = vmatprep.subr.mxu0 0.0
        %922 = vmatpush1.msra.mxu0 0.0
        %923 = vmatprep.subr.mxu0 0.0
        %924 = vmatpush1.msra.mxu0 0.0
        %925 = vmatprep.subr.mxu0 0.0
        %926 = vmatpush1.msra.mxu0 0.0
        %927 = vmatprep.subr.mxu0 0.0
        %928 = vmatpush1.msra.mxu0 0.0
        %929 = vmatprep.subr.mxu0 0.0
        %930 = vmatpush1.msra.mxu0 0.0
        %931 = vmatprep.subr.mxu0 0.0
        %932 = vmatpush1.msra.mxu0 0.0
        %933 = vmatprep.subr.mxu0 0.0
        %934 = vmatpush1.msra.mxu0 0.0
        %935 = vmatprep.subr.mxu0 0.0
        %936 = vmatpush1.msra.mxu0 0.0
        %937 = vmatprep.subr.mxu0 %v903
        %938 = vmatpush1.msra.mxu0 %v902
        %939 = vmatprep.subr.mxu0 0.0
        %940 = vmatpush2.msra.mxu0 0.0
        %941 = vmatprep.subr.mxu0 0.0
        %942 = vmatpush2.msra.mxu0 0.0
        %943 = vmatprep.subr.mxu0 0.0
        %944 = vmatpush2.msra.mxu0 0.0
        %945 = vmatprep.subr.mxu0 0.0
        %946 = vmatpush2.msra.mxu0 0.0
        %947 = vmatprep.subr.mxu0 0.0
        %948 = vmatpush2.msra.mxu0 0.0
        %949 = vmatprep.subr.mxu0 0.0
        %950 = vmatpush2.msra.mxu0 0.0
        %951 = vmatprep.subr.mxu0 0.0
        %952 = vmatpush2.msra.mxu0 0.0
        %953 = vmatprep.subr.mxu0 0.0
        %954 = vmatpush2.msra.mxu0 0.0
        %955 = vmatprep.subr.mxu0 0.0
        %956 = vmatpush2.msra.mxu0 0.0
        %957 = vmatprep.subr.mxu0 0.0
        %958 = vmatpush2.msra.mxu0 0.0
        %959 = vmatprep.subr.mxu0 0.0
        %960 = vmatpush2.msra.mxu0 0.0
        %961 = vmatprep.subr.mxu0 0.0
        %962 = vmatpush2.msra.mxu0 0.0
        %963 = vmatprep.subr.mxu0 0.0
        %964 = vmatpush2.msra.mxu0 0.0
        %965 = vmatprep.subr.mxu0 0.0
        %966 = vmatpush2.msra.mxu0 0.0
        %967 = vmatprep.subr.mxu0 0.0
        %968 = vmatpush2.msra.mxu0 0.0
        %969 = vmatprep.subr.mxu0 0.0
        %970 = vmatpush2.msra.mxu0 0.0
        %971 = vmatprep.mubr.f32.mxu0 0.0
        %972 = vmatmul.mubr.f32.gmra.mxu0 %v905
        %v973 = vpop.f32.mrf.mxu0
        %v974 = vadd.f32 0.0, %v973
        %v975 = vpop.f32.mrf.mxu0
        %v976 = vadd.f32 0.0, %v975
        %977 = vdwg.mxu0
        %v978 = vadd.f32 %v889, %v974
        %v979 = vadd.f32 %v890, %v976
        %980 = vrot.lane.b32.xlu0 %v282, 111
        %v981 = vpop.permute.xlu0 %980
        %982 = vrot.lane.b32.xlu0 %v283, 111
        %v983 = vpop.permute.xlu0 %982
        %vm984 = vcmp.lt.s32.totalorder %v224, 111
        %v985 = vsel %vm984, %v981, %v983
        %v986 = vsel %vm984, %v983, %v981
        %v987 = vsel %vm244, 1, 0
        %v988 = vsel %vm245, 1, 0
        %vm989 = vcmp.eq.s32.totalorder %v987, 1
        %vm990 = vcmp.eq.s32.totalorder %v988, 1
        %v991 = vsel %vm989, %v985, 0.0
        %v992 = vsel %vm990, %v986, 0.0
        %v994 = vsel %vm310, %v262, 0
        %996 = vmatprep.subr.mxu0 0.0
        %997 = vmatpush1.msra.mxu0 0.0
        %998 = vmatprep.subr.mxu0 0.0
        %999 = vmatpush1.msra.mxu0 0.0
        %1000 = vmatprep.subr.mxu0 0.0
        %1001 = vmatpush1.msra.mxu0 0.0
        %1002 = vmatprep.subr.mxu0 0.0
        %1003 = vmatpush1.msra.mxu0 0.0
        %1004 = vmatprep.subr.mxu0 0.0
        %1005 = vmatpush1.msra.mxu0 0.0
        %1006 = vmatprep.subr.mxu0 0.0
        %1007 = vmatpush1.msra.mxu0 0.0
        %1008 = vmatprep.subr.mxu0 0.0
        %1009 = vmatpush1.msra.mxu0 0.0
        %1010 = vmatprep.subr.mxu0 0.0
        %1011 = vmatpush1.msra.mxu0 0.0
        %1012 = vmatprep.subr.mxu0 0.0
        %1013 = vmatpush1.msra.mxu0 0.0
        %1014 = vmatprep.subr.mxu0 0.0
        %1015 = vmatpush1.msra.mxu0 0.0
        %1016 = vmatprep.subr.mxu0 0.0
        %1017 = vmatpush1.msra.mxu0 0.0
        %1018 = vmatprep.subr.mxu0 0.0
        %1019 = vmatpush1.msra.mxu0 0.0
        %1020 = vmatprep.subr.mxu0 0.0
        %1021 = vmatpush1.msra.mxu0 0.0
        %1022 = vmatprep.subr.mxu0 0.0
        %1023 = vmatpush1.msra.mxu0 0.0
        %1024 = vmatprep.subr.mxu0 0.0
        %1025 = vmatpush1.msra.mxu0 0.0
        %1026 = vmatprep.subr.mxu0 %v992
        %1027 = vmatpush1.msra.mxu0 %v991
        %1028 = vmatprep.subr.mxu0 0.0
        %1029 = vmatpush2.msra.mxu0 0.0
        %1030 = vmatprep.subr.mxu0 0.0
        %1031 = vmatpush2.msra.mxu0 0.0
        %1032 = vmatprep.subr.mxu0 0.0
        %1033 = vmatpush2.msra.mxu0 0.0
        %1034 = vmatprep.subr.mxu0 0.0
        %1035 = vmatpush2.msra.mxu0 0.0
        %1036 = vmatprep.subr.mxu0 0.0
        %1037 = vmatpush2.msra.mxu0 0.0
        %1038 = vmatprep.subr.mxu0 0.0
        %1039 = vmatpush2.msra.mxu0 0.0
        %1040 = vmatprep.subr.mxu0 0.0
        %1041 = vmatpush2.msra.mxu0 0.0
        %1042 = vmatprep.subr.mxu0 0.0
        %1043 = vmatpush2.msra.mxu0 0.0
        %1044 = vmatprep.subr.mxu0 0.0
        %1045 = vmatpush2.msra.mxu0 0.0
        %1046 = vmatprep.subr.mxu0 0.0
        %1047 = vmatpush2.msra.mxu0 0.0
        %1048 = vmatprep.subr.mxu0 0.0
        %1049 = vmatpush2.msra.mxu0 0.0
        %1050 = vmatprep.subr.mxu0 0.0
        %1051 = vmatpush2.msra.mxu0 0.0
        %1052 = vmatprep.subr.mxu0 0.0
        %1053 = vmatpush2.msra.mxu0 0.0
        %1054 = vmatprep.subr.mxu0 0.0
        %1055 = vmatpush2.msra.mxu0 0.0
        %1056 = vmatprep.subr.mxu0 0.0
        %1057 = vmatpush2.msra.mxu0 0.0
        %1058 = vmatprep.subr.mxu0 0.0
        %1059 = vmatpush2.msra.mxu0 0.0
        %1060 = vmatprep.mubr.f32.mxu0 0.0
        %1061 = vmatmul.mubr.f32.gmra.mxu0 %v994
        %v1062 = vpop.f32.mrf.mxu0
        %v1063 = vadd.f32 0.0, %v1062
        %v1064 = vpop.f32.mrf.mxu0
        %v1065 = vadd.f32 0.0, %v1064
        %1066 = vdwg.mxu0
        %v1067 = vadd.f32 %v978, %v1063
        %v1068 = vadd.f32 %v979, %v1065
        %1070 = vset.pattern.permute.xlu0 0
        %1071 = vperm.xlu0 %1070, %v280
        %v1072 = vpop.permute.xlu0 %1071
        %v1074 = vmul.f32 %v1067, %v1072
        %v1075 = vmul.f32 %v1068, %v1072
        %1077 = vset.pattern.permute.xlu0 0
        %1078 = vperm.xlu0 %1077, %v281
        %v1079 = vpop.permute.xlu0 %1078
        %v1081 = vadd.f32 %v1074, %v1079
        %v1082 = vadd.f32 %v1075, %v1079
        %v1083 = vmax.f32 %v1081, 0.0
        %v1084 = vmax.f32 %v1082, 0.0
        %1085 = vrot.lane.b32.xlu0 %v1083, 17
        %v1086 = vpop.permute.xlu0 %1085
        %1087 = vrot.lane.b32.xlu0 %v1084, 17
        %v1088 = vpop.permute.xlu0 %1087
        %v1089 = vsel %vm288, %v1086, %v1088
        %v1090 = vsel %vm288, %v1088, %v1086
        %v1091 = vsel %vm293, %v1090, 0.0
        %v1092 = vsel %vm294, %v1089, 0.0
        %1093 = vrot.lane.b32.xlu0 %v1083, 16
        %v1094 = vpop.permute.xlu0 %1093
        %1095 = vrot.lane.b32.xlu0 %v1084, 16
        %v1096 = vpop.permute.xlu0 %1095
        %v1097 = vsel %vm301, %v1094, %v1096
        %v1098 = vsel %vm301, %v1096, %v1094
        %v1099 = vsel %vm306, %v1098, 0.0
        %v1100 = vsel %vm307, %v1097, 0.0
        %v1102 = vsel %vm310, %v265, 0
        %1104 = vmatprep.subr.mxu0 0.0
        %1105 = vmatpush1.msra.mxu0 0.0
        %1106 = vmatprep.subr.mxu0 0.0
        %1107 = vmatpush1.msra.mxu0 0.0
        %1108 = vmatprep.subr.mxu0 0.0
        %1109 = vmatpush1.msra.mxu0 0.0
        %1110 = vmatprep.subr.mxu0 0.0
        %1111 = vmatpush1.msra.mxu0 0.0
        %1112 = vmatprep.subr.mxu0 0.0
        %1113 = vmatpush1.msra.mxu0 0.0
        %1114 = vmatprep.subr.mxu0 0.0
        %1115 = vmatpush1.msra.mxu0 0.0
        %1116 = vmatprep.subr.mxu0 0.0
        %1117 = vmatpush1.msra.mxu0 0.0
        %1118 = vmatprep.subr.mxu0 0.0
        %1119 = vmatpush1.msra.mxu0 0.0
        %1120 = vmatprep.subr.mxu0 0.0
        %1121 = vmatpush1.msra.mxu0 0.0
        %1122 = vmatprep.subr.mxu0 0.0
        %1123 = vmatpush1.msra.mxu0 0.0
        %1124 = vmatprep.subr.mxu0 0.0
        %1125 = vmatpush1.msra.mxu0 0.0
        %1126 = vmatprep.subr.mxu0 0.0
        %1127 = vmatpush1.msra.mxu0 0.0
        %1128 = vmatprep.subr.mxu0 0.0
        %1129 = vmatpush1.msra.mxu0 0.0
        %1130 = vmatprep.subr.mxu0 0.0
        %1131 = vmatpush1.msra.mxu0 0.0
        %1132 = vmatprep.subr.mxu0 0.0
        %1133 = vmatpush1.msra.mxu0 0.0
        %1134 = vmatprep.subr.mxu0 %v1100
        %1135 = vmatpush1.msra.mxu0 %v1099
        %1136 = vmatprep.subr.mxu0 0.0
        %1137 = vmatpush2.msra.mxu0 0.0
        %1138 = vmatprep.subr.mxu0 0.0
        %1139 = vmatpush2.msra.mxu0 0.0
        %1140 = vmatprep.subr.mxu0 0.0
        %1141 = vmatpush2.msra.mxu0 0.0
        %1142 = vmatprep.subr.mxu0 0.0
        %1143 = vmatpush2.msra.mxu0 0.0
        %1144 = vmatprep.subr.mxu0 0.0
        %1145 = vmatpush2.msra.mxu0 0.0
        %1146 = vmatprep.subr.mxu0 0.0
        %1147 = vmatpush2.msra.mxu0 0.0
        %1148 = vmatprep.subr.mxu0 0.0
        %1149 = vmatpush2.msra.mxu0 0.0
        %1150 = vmatprep.subr.mxu0 0.0
        %1151 = vmatpush2.msra.mxu0 0.0
        %1152 = vmatprep.subr.mxu0 0.0
        %1153 = vmatpush2.msra.mxu0 0.0
        %1154 = vmatprep.subr.mxu0 0.0
        %1155 = vmatpush2.msra.mxu0 0.0
        %1156 = vmatprep.subr.mxu0 0.0
        %1157 = vmatpush2.msra.mxu0 0.0
        %1158 = vmatprep.subr.mxu0 0.0
        %1159 = vmatpush2.msra.mxu0 0.0
        %1160 = vmatprep.subr.mxu0 0.0
        %1161 = vmatpush2.msra.mxu0 0.0
        %1162 = vmatprep.subr.mxu0 0.0
        %1163 = vmatpush2.msra.mxu0 0.0
        %1164 = vmatprep.subr.mxu0 0.0
        %1165 = vmatpush2.msra.mxu0 0.0
        %1166 = vmatprep.subr.mxu0 0.0
        %1167 = vmatpush2.msra.mxu0 0.0
        %1168 = vmatprep.mubr.f32.mxu0 0.0
        %1169 = vmatmul.mubr.f32.gmra.mxu0 %v1102
        %v1170 = vpop.f32.mrf.mxu0
        %v1171 = vadd.f32 0.0, %v1170
        %v1172 = vpop.f32.mrf.mxu0
        %v1173 = vadd.f32 0.0, %v1172
        %1174 = vdwg.mxu0
        %v1176 = vsel %vm310, %v263, 0
        %1178 = vmatprep.subr.mxu0 0.0
        %1179 = vmatpush1.msra.mxu0 0.0
        %1180 = vmatprep.subr.mxu0 0.0
        %1181 = vmatpush1.msra.mxu0 0.0
        %1182 = vmatprep.subr.mxu0 0.0
        %1183 = vmatpush1.msra.mxu0 0.0
        %1184 = vmatprep.subr.mxu0 0.0
        %1185 = vmatpush1.msra.mxu0 0.0
        %1186 = vmatprep.subr.mxu0 0.0
        %1187 = vmatpush1.msra.mxu0 0.0
        %1188 = vmatprep.subr.mxu0 0.0
        %1189 = vmatpush1.msra.mxu0 0.0
        %1190 = vmatprep.subr.mxu0 0.0
        %1191 = vmatpush1.msra.mxu0 0.0
        %1192 = vmatprep.subr.mxu0 0.0
        %1193 = vmatpush1.msra.mxu0 0.0
        %1194 = vmatprep.subr.mxu0 0.0
        %1195 = vmatpush1.msra.mxu0 0.0
        %1196 = vmatprep.subr.mxu0 0.0
        %1197 = vmatpush1.msra.mxu0 0.0
        %1198 = vmatprep.subr.mxu0 0.0
        %1199 = vmatpush1.msra.mxu0 0.0
        %1200 = vmatprep.subr.mxu0 0.0
        %1201 = vmatpush1.msra.mxu0 0.0
        %1202 = vmatprep.subr.mxu0 0.0
        %1203 = vmatpush1.msra.mxu0 0.0
        %1204 = vmatprep.subr.mxu0 0.0
        %1205 = vmatpush1.msra.mxu0 0.0
        %1206 = vmatprep.subr.mxu0 0.0
        %1207 = vmatpush1.msra.mxu0 0.0
        %1208 = vmatprep.subr.mxu0 %v1092
        %1209 = vmatpush1.msra.mxu0 %v1091
        %1210 = vmatprep.subr.mxu0 0.0
        %1211 = vmatpush2.msra.mxu0 0.0
        %1212 = vmatprep.subr.mxu0 0.0
        %1213 = vmatpush2.msra.mxu0 0.0
        %1214 = vmatprep.subr.mxu0 0.0
        %1215 = vmatpush2.msra.mxu0 0.0
        %1216 = vmatprep.subr.mxu0 0.0
        %1217 = vmatpush2.msra.mxu0 0.0
        %1218 = vmatprep.subr.mxu0 0.0
        %1219 = vmatpush2.msra.mxu0 0.0
        %1220 = vmatprep.subr.mxu0 0.0
        %1221 = vmatpush2.msra.mxu0 0.0
        %1222 = vmatprep.subr.mxu0 0.0
        %1223 = vmatpush2.msra.mxu0 0.0
        %1224 = vmatprep.subr.mxu0 0.0
        %1225 = vmatpush2.msra.mxu0 0.0
        %1226 = vmatprep.subr.mxu0 0.0
        %1227 = vmatpush2.msra.mxu0 0.0
        %1228 = vmatprep.subr.mxu0 0.0
        %1229 = vmatpush2.msra.mxu0 0.0
        %1230 = vmatprep.subr.mxu0 0.0
        %1231 = vmatpush2.msra.mxu0 0.0
        %1232 = vmatprep.subr.mxu0 0.0
        %1233 = vmatpush2.msra.mxu0 0.0
        %1234 = vmatprep.subr.mxu0 0.0
        %1235 = vmatpush2.msra.mxu0 0.0
        %1236 = vmatprep.subr.mxu0 0.0
        %1237 = vmatpush2.msra.mxu0 0.0
        %1238 = vmatprep.subr.mxu0 0.0
        %1239 = vmatpush2.msra.mxu0 0.0
        %1240 = vmatprep.subr.mxu0 0.0
        %1241 = vmatpush2.msra.mxu0 0.0
        %1242 = vmatprep.mubr.f32.mxu0 0.0
        %1243 = vmatmul.mubr.f32.gmra.mxu0 %v1176
        %v1244 = vpop.f32.mrf.mxu0
        %v1245 = vadd.f32 %v1171, %v1244
        %v1246 = vpop.f32.mrf.mxu0
        %v1247 = vadd.f32 %v1173, %v1246
        %1248 = vdwg.mxu0
        %1249 = vrot.lane.b32.xlu0 %v1083, 15
        %v1250 = vpop.permute.xlu0 %1249
        %1251 = vrot.lane.b32.xlu0 %v1084, 15
        %v1252 = vpop.permute.xlu0 %1251
        %v1253 = vsel %vm463, %v1250, %v1252
        %v1254 = vsel %vm463, %v1252, %v1250
        %v1255 = vsel %vm468, %v1254, 0.0
        %v1256 = vsel %vm469, %v1253, 0.0
        %v1258 = vsel %vm310, %v267, 0
        %1260 = vmatprep.subr.mxu0 0.0
        %1261 = vmatpush1.msra.mxu0 0.0
        %1262 = vmatprep.subr.mxu0 0.0
        %1263 = vmatpush1.msra.mxu0 0.0
        %1264 = vmatprep.subr.mxu0 0.0
        %1265 = vmatpush1.msra.mxu0 0.0
        %1266 = vmatprep.subr.mxu0 0.0
        %1267 = vmatpush1.msra.mxu0 0.0
        %1268 = vmatprep.subr.mxu0 0.0
        %1269 = vmatpush1.msra.mxu0 0.0
        %1270 = vmatprep.subr.mxu0 0.0
        %1271 = vmatpush1.msra.mxu0 0.0
        %1272 = vmatprep.subr.mxu0 0.0
        %1273 = vmatpush1.msra.mxu0 0.0
        %1274 = vmatprep.subr.mxu0 0.0
        %1275 = vmatpush1.msra.mxu0 0.0
        %1276 = vmatprep.subr.mxu0 0.0
        %1277 = vmatpush1.msra.mxu0 0.0
        %1278 = vmatprep.subr.mxu0 0.0
        %1279 = vmatpush1.msra.mxu0 0.0
        %1280 = vmatprep.subr.mxu0 0.0
        %1281 = vmatpush1.msra.mxu0 0.0
        %1282 = vmatprep.subr.mxu0 0.0
        %1283 = vmatpush1.msra.mxu0 0.0
        %1284 = vmatprep.subr.mxu0 0.0
        %1285 = vmatpush1.msra.mxu0 0.0
        %1286 = vmatprep.subr.mxu0 0.0
        %1287 = vmatpush1.msra.mxu0 0.0
        %1288 = vmatprep.subr.mxu0 0.0
        %1289 = vmatpush1.msra.mxu0 0.0
        %1290 = vmatprep.subr.mxu0 %v1256
        %1291 = vmatpush1.msra.mxu0 %v1255
        %1292 = vmatprep.subr.mxu0 0.0
        %1293 = vmatpush2.msra.mxu0 0.0
        %1294 = vmatprep.subr.mxu0 0.0
        %1295 = vmatpush2.msra.mxu0 0.0
        %1296 = vmatprep.subr.mxu0 0.0
        %1297 = vmatpush2.msra.mxu0 0.0
        %1298 = vmatprep.subr.mxu0 0.0
        %1299 = vmatpush2.msra.mxu0 0.0
        %1300 = vmatprep.subr.mxu0 0.0
        %1301 = vmatpush2.msra.mxu0 0.0
        %1302 = vmatprep.subr.mxu0 0.0
        %1303 = vmatpush2.msra.mxu0 0.0
        %1304 = vmatprep.subr.mxu0 0.0
        %1305 = vmatpush2.msra.mxu0 0.0
        %1306 = vmatprep.subr.mxu0 0.0
        %1307 = vmatpush2.msra.mxu0 0.0
        %1308 = vmatprep.subr.mxu0 0.0
        %1309 = vmatpush2.msra.mxu0 0.0
        %1310 = vmatprep.subr.mxu0 0.0
        %1311 = vmatpush2.msra.mxu0 0.0
        %1312 = vmatprep.subr.mxu0 0.0
        %1313 = vmatpush2.msra.mxu0 0.0
        %1314 = vmatprep.subr.mxu0 0.0
        %1315 = vmatpush2.msra.mxu0 0.0
        %1316 = vmatprep.subr.mxu0 0.0
        %1317 = vmatpush2.msra.mxu0 0.0
        %1318 = vmatprep.subr.mxu0 0.0
        %1319 = vmatpush2.msra.mxu0 0.0
        %1320 = vmatprep.subr.mxu0 0.0
        %1321 = vmatpush2.msra.mxu0 0.0
        %1322 = vmatprep.subr.mxu0 0.0
        %1323 = vmatpush2.msra.mxu0 0.0
        %1324 = vmatprep.mubr.f32.mxu0 0.0
        %1325 = vmatmul.mubr.f32.gmra.mxu0 %v1258
        %v1326 = vpop.f32.mrf.mxu0
        %v1327 = vadd.f32 0.0, %v1326
        %v1328 = vpop.f32.mrf.mxu0
        %v1329 = vadd.f32 0.0, %v1328
        %1330 = vdwg.mxu0
        %v1331 = vadd.f32 %v1245, %v1327
        %v1332 = vadd.f32 %v1247, %v1329
        %1333 = vrot.lane.b32.xlu0 %v1083, 1
        %v1334 = vpop.permute.xlu0 %1333
        %1335 = vrot.lane.b32.xlu0 %v1084, 1
        %v1336 = vpop.permute.xlu0 %1335
        %v1337 = vsel %vm552, %v1334, %v1336
        %v1338 = vsel %vm552, %v1336, %v1334
        %v1339 = vsel %vm557, %v1338, 0.0
        %v1340 = vsel %vm558, %v1337, 0.0
        %v1342 = vsel %vm310, %v269, 0
        %1344 = vmatprep.subr.mxu0 0.0
        %1345 = vmatpush1.msra.mxu0 0.0
        %1346 = vmatprep.subr.mxu0 0.0
        %1347 = vmatpush1.msra.mxu0 0.0
        %1348 = vmatprep.subr.mxu0 0.0
        %1349 = vmatpush1.msra.mxu0 0.0
        %1350 = vmatprep.subr.mxu0 0.0
        %1351 = vmatpush1.msra.mxu0 0.0
        %1352 = vmatprep.subr.mxu0 0.0
        %1353 = vmatpush1.msra.mxu0 0.0
        %1354 = vmatprep.subr.mxu0 0.0
        %1355 = vmatpush1.msra.mxu0 0.0
        %1356 = vmatprep.subr.mxu0 0.0
        %1357 = vmatpush1.msra.mxu0 0.0
        %1358 = vmatprep.subr.mxu0 0.0
        %1359 = vmatpush1.msra.mxu0 0.0
        %1360 = vmatprep.subr.mxu0 0.0
        %1361 = vmatpush1.msra.mxu0 0.0
        %1362 = vmatprep.subr.mxu0 0.0
        %1363 = vmatpush1.msra.mxu0 0.0
        %1364 = vmatprep.subr.mxu0 0.0
        %1365 = vmatpush1.msra.mxu0 0.0
        %1366 = vmatprep.subr.mxu0 0.0
        %1367 = vmatpush1.msra.mxu0 0.0
        %1368 = vmatprep.subr.mxu0 0.0
        %1369 = vmatpush1.msra.mxu0 0.0
        %1370 = vmatprep.subr.mxu0 0.0
        %1371 = vmatpush1.msra.mxu0 0.0
        %1372 = vmatprep.subr.mxu0 0.0
        %1373 = vmatpush1.msra.mxu0 0.0
        %1374 = vmatprep.subr.mxu0 %v1340
        %1375 = vmatpush1.msra.mxu0 %v1339
        %1376 = vmatprep.subr.mxu0 0.0
        %1377 = vmatpush2.msra.mxu0 0.0
        %1378 = vmatprep.subr.mxu0 0.0
        %1379 = vmatpush2.msra.mxu0 0.0
        %1380 = vmatprep.subr.mxu0 0.0
        %1381 = vmatpush2.msra.mxu0 0.0
        %1382 = vmatprep.subr.mxu0 0.0
        %1383 = vmatpush2.msra.mxu0 0.0
        %1384 = vmatprep.subr.mxu0 0.0
        %1385 = vmatpush2.msra.mxu0 0.0
        %1386 = vmatprep.subr.mxu0 0.0
        %1387 = vmatpush2.msra.mxu0 0.0
        %1388 = vmatprep.subr.mxu0 0.0
        %1389 = vmatpush2.msra.mxu0 0.0
        %1390 = vmatprep.subr.mxu0 0.0
        %1391 = vmatpush2.msra.mxu0 0.0
        %1392 = vmatprep.subr.mxu0 0.0
        %1393 = vmatpush2.msra.mxu0 0.0
        %1394 = vmatprep.subr.mxu0 0.0
        %1395 = vmatpush2.msra.mxu0 0.0
        %1396 = vmatprep.subr.mxu0 0.0
        %1397 = vmatpush2.msra.mxu0 0.0
        %1398 = vmatprep.subr.mxu0 0.0
        %1399 = vmatpush2.msra.mxu0 0.0
        %1400 = vmatprep.subr.mxu0 0.0
        %1401 = vmatpush2.msra.mxu0 0.0
        %1402 = vmatprep.subr.mxu0 0.0
        %1403 = vmatpush2.msra.mxu0 0.0
        %1404 = vmatprep.subr.mxu0 0.0
        %1405 = vmatpush2.msra.mxu0 0.0
        %1406 = vmatprep.subr.mxu0 0.0
        %1407 = vmatpush2.msra.mxu0 0.0
        %1408 = vmatprep.mubr.f32.mxu0 0.0
        %1409 = vmatmul.mubr.f32.gmra.mxu0 %v1342
        %v1410 = vpop.f32.mrf.mxu0
        %v1411 = vadd.f32 0.0, %v1410
        %v1412 = vpop.f32.mrf.mxu0
        %v1413 = vadd.f32 0.0, %v1412
        %1414 = vdwg.mxu0
        %v1415 = vadd.f32 %v1331, %v1411
        %v1416 = vadd.f32 %v1332, %v1413
        %v1418 = vsel %vm310, %v271, 0
        %1420 = vmatprep.subr.mxu0 0.0
        %1421 = vmatpush1.msra.mxu0 0.0
        %1422 = vmatprep.subr.mxu0 0.0
        %1423 = vmatpush1.msra.mxu0 0.0
        %1424 = vmatprep.subr.mxu0 0.0
        %1425 = vmatpush1.msra.mxu0 0.0
        %1426 = vmatprep.subr.mxu0 0.0
        %1427 = vmatpush1.msra.mxu0 0.0
        %1428 = vmatprep.subr.mxu0 0.0
        %1429 = vmatpush1.msra.mxu0 0.0
        %1430 = vmatprep.subr.mxu0 0.0
        %1431 = vmatpush1.msra.mxu0 0.0
        %1432 = vmatprep.subr.mxu0 0.0
        %1433 = vmatpush1.msra.mxu0 0.0
        %1434 = vmatprep.subr.mxu0 0.0
        %1435 = vmatpush1.msra.mxu0 0.0
        %1436 = vmatprep.subr.mxu0 0.0
        %1437 = vmatpush1.msra.mxu0 0.0
        %1438 = vmatprep.subr.mxu0 0.0
        %1439 = vmatpush1.msra.mxu0 0.0
        %1440 = vmatprep.subr.mxu0 0.0
        %1441 = vmatpush1.msra.mxu0 0.0
        %1442 = vmatprep.subr.mxu0 0.0
        %1443 = vmatpush1.msra.mxu0 0.0
        %1444 = vmatprep.subr.mxu0 0.0
        %1445 = vmatpush1.msra.mxu0 0.0
        %1446 = vmatprep.subr.mxu0 0.0
        %1447 = vmatpush1.msra.mxu0 0.0
        %1448 = vmatprep.subr.mxu0 0.0
        %1449 = vmatpush1.msra.mxu0 0.0
        %1450 = vmatprep.subr.mxu0 %v1084
        %1451 = vmatpush1.msra.mxu0 %v1083
        %1452 = vmatprep.subr.mxu0 0.0
        %1453 = vmatpush2.msra.mxu0 0.0
        %1454 = vmatprep.subr.mxu0 0.0
        %1455 = vmatpush2.msra.mxu0 0.0
        %1456 = vmatprep.subr.mxu0 0.0
        %1457 = vmatpush2.msra.mxu0 0.0
        %1458 = vmatprep.subr.mxu0 0.0
        %1459 = vmatpush2.msra.mxu0 0.0
        %1460 = vmatprep.subr.mxu0 0.0
        %1461 = vmatpush2.msra.mxu0 0.0
        %1462 = vmatprep.subr.mxu0 0.0
        %1463 = vmatpush2.msra.mxu0 0.0
        %1464 = vmatprep.subr.mxu0 0.0
        %1465 = vmatpush2.msra.mxu0 0.0
        %1466 = vmatprep.subr.mxu0 0.0
        %1467 = vmatpush2.msra.mxu0 0.0
        %1468 = vmatprep.subr.mxu0 0.0
        %1469 = vmatpush2.msra.mxu0 0.0
        %1470 = vmatprep.subr.mxu0 0.0
        %1471 = vmatpush2.msra.mxu0 0.0
        %1472 = vmatprep.subr.mxu0 0.0
        %1473 = vmatpush2.msra.mxu0 0.0
        %1474 = vmatprep.subr.mxu0 0.0
        %1475 = vmatpush2.msra.mxu0 0.0
        %1476 = vmatprep.subr.mxu0 0.0
        %1477 = vmatpush2.msra.mxu0 0.0
        %1478 = vmatprep.subr.mxu0 0.0
        %1479 = vmatpush2.msra.mxu0 0.0
        %1480 = vmatprep.subr.mxu0 0.0
        %1481 = vmatpush2.msra.mxu0 0.0
        %1482 = vmatprep.subr.mxu0 0.0
        %1483 = vmatpush2.msra.mxu0 0.0
        %1484 = vmatprep.mubr.f32.mxu0 0.0
        %1485 = vmatmul.mubr.f32.gmra.mxu0 %v1418
        %v1486 = vpop.f32.mrf.mxu0
        %v1487 = vadd.f32 0.0, %v1486
        %v1488 = vpop.f32.mrf.mxu0
        %v1489 = vadd.f32 0.0, %v1488
        %1490 = vdwg.mxu0
        %v1491 = vadd.f32 %v1415, %v1487
        %v1492 = vadd.f32 %v1416, %v1489
        %1493 = vrot.lane.b32.xlu0 %v1083, 127
        %v1494 = vpop.permute.xlu0 %1493
        %1495 = vrot.lane.b32.xlu0 %v1084, 127
        %v1496 = vpop.permute.xlu0 %1495
        %v1497 = vsel %vm717, %v1494, %v1496
        %v1498 = vsel %vm717, %v1496, %v1494
        %v1499 = vsel %vm722, %v1497, 0.0
        %v1500 = vsel %vm723, %v1498, 0.0
        %v1502 = vsel %vm310, %v273, 0
        %1504 = vmatprep.subr.mxu0 0.0
        %1505 = vmatpush1.msra.mxu0 0.0
        %1506 = vmatprep.subr.mxu0 0.0
        %1507 = vmatpush1.msra.mxu0 0.0
        %1508 = vmatprep.subr.mxu0 0.0
        %1509 = vmatpush1.msra.mxu0 0.0
        %1510 = vmatprep.subr.mxu0 0.0
        %1511 = vmatpush1.msra.mxu0 0.0
        %1512 = vmatprep.subr.mxu0 0.0
        %1513 = vmatpush1.msra.mxu0 0.0
        %1514 = vmatprep.subr.mxu0 0.0
        %1515 = vmatpush1.msra.mxu0 0.0
        %1516 = vmatprep.subr.mxu0 0.0
        %1517 = vmatpush1.msra.mxu0 0.0
        %1518 = vmatprep.subr.mxu0 0.0
        %1519 = vmatpush1.msra.mxu0 0.0
        %1520 = vmatprep.subr.mxu0 0.0
        %1521 = vmatpush1.msra.mxu0 0.0
        %1522 = vmatprep.subr.mxu0 0.0
        %1523 = vmatpush1.msra.mxu0 0.0
        %1524 = vmatprep.subr.mxu0 0.0
        %1525 = vmatpush1.msra.mxu0 0.0
        %1526 = vmatprep.subr.mxu0 0.0
        %1527 = vmatpush1.msra.mxu0 0.0
        %1528 = vmatprep.subr.mxu0 0.0
        %1529 = vmatpush1.msra.mxu0 0.0
        %1530 = vmatprep.subr.mxu0 0.0
        %1531 = vmatpush1.msra.mxu0 0.0
        %1532 = vmatprep.subr.mxu0 0.0
        %1533 = vmatpush1.msra.mxu0 0.0
        %1534 = vmatprep.subr.mxu0 %v1500
        %1535 = vmatpush1.msra.mxu0 %v1499
        %1536 = vmatprep.subr.mxu0 0.0
        %1537 = vmatpush2.msra.mxu0 0.0
        %1538 = vmatprep.subr.mxu0 0.0
        %1539 = vmatpush2.msra.mxu0 0.0
        %1540 = vmatprep.subr.mxu0 0.0
        %1541 = vmatpush2.msra.mxu0 0.0
        %1542 = vmatprep.subr.mxu0 0.0
        %1543 = vmatpush2.msra.mxu0 0.0
        %1544 = vmatprep.subr.mxu0 0.0
        %1545 = vmatpush2.msra.mxu0 0.0
        %1546 = vmatprep.subr.mxu0 0.0
        %1547 = vmatpush2.msra.mxu0 0.0
        %1548 = vmatprep.subr.mxu0 0.0
        %1549 = vmatpush2.msra.mxu0 0.0
        %1550 = vmatprep.subr.mxu0 0.0
        %1551 = vmatpush2.msra.mxu0 0.0
        %1552 = vmatprep.subr.mxu0 0.0
        %1553 = vmatpush2.msra.mxu0 0.0
        %1554 = vmatprep.subr.mxu0 0.0
        %1555 = vmatpush2.msra.mxu0 0.0
        %1556 = vmatprep.subr.mxu0 0.0
        %1557 = vmatpush2.msra.mxu0 0.0
        %1558 = vmatprep.subr.mxu0 0.0
        %1559 = vmatpush2.msra.mxu0 0.0
        %1560 = vmatprep.subr.mxu0 0.0
        %1561 = vmatpush2.msra.mxu0 0.0
        %1562 = vmatprep.subr.mxu0 0.0
        %1563 = vmatpush2.msra.mxu0 0.0
        %1564 = vmatprep.subr.mxu0 0.0
        %1565 = vmatpush2.msra.mxu0 0.0
        %1566 = vmatprep.subr.mxu0 0.0
        %1567 = vmatpush2.msra.mxu0 0.0
        %1568 = vmatprep.mubr.f32.mxu0 0.0
        %1569 = vmatmul.mubr.f32.gmra.mxu0 %v1502
        %v1570 = vpop.f32.mrf.mxu0
        %v1571 = vadd.f32 0.0, %v1570
        %v1572 = vpop.f32.mrf.mxu0
        %v1573 = vadd.f32 0.0, %v1572
        %1574 = vdwg.mxu0
        %v1575 = vadd.f32 %v1491, %v1571
        %v1576 = vadd.f32 %v1492, %v1573
        %1577 = vrot.lane.b32.xlu0 %v1083, 113
        %v1578 = vpop.permute.xlu0 %1577
        %1579 = vrot.lane.b32.xlu0 %v1084, 113
        %v1580 = vpop.permute.xlu0 %1579
        %v1581 = vsel %vm806, %v1578, %v1580
        %v1582 = vsel %vm806, %v1580, %v1578
        %v1583 = vsel %vm811, %v1581, 0.0
        %v1584 = vsel %vm812, %v1582, 0.0
        %v1586 = vsel %vm310, %v275, 0
        %1588 = vmatprep.subr.mxu0 0.0
        %1589 = vmatpush1.msra.mxu0 0.0
        %1590 = vmatprep.subr.mxu0 0.0
        %1591 = vmatpush1.msra.mxu0 0.0
        %1592 = vmatprep.subr.mxu0 0.0
        %1593 = vmatpush1.msra.mxu0 0.0
        %1594 = vmatprep.subr.mxu0 0.0
        %1595 = vmatpush1.msra.mxu0 0.0
        %1596 = vmatprep.subr.mxu0 0.0
        %1597 = vmatpush1.msra.mxu0 0.0
        %1598 = vmatprep.subr.mxu0 0.0
        %1599 = vmatpush1.msra.mxu0 0.0
        %1600 = vmatprep.subr.mxu0 0.0
        %1601 = vmatpush1.msra.mxu0 0.0
        %1602 = vmatprep.subr.mxu0 0.0
        %1603 = vmatpush1.msra.mxu0 0.0
        %1604 = vmatprep.subr.mxu0 0.0
        %1605 = vmatpush1.msra.mxu0 0.0
        %1606 = vmatprep.subr.mxu0 0.0
        %1607 = vmatpush1.msra.mxu0 0.0
        %1608 = vmatprep.subr.mxu0 0.0
        %1609 = vmatpush1.msra.mxu0 0.0
        %1610 = vmatprep.subr.mxu0 0.0
        %1611 = vmatpush1.msra.mxu0 0.0
        %1612 = vmatprep.subr.mxu0 0.0
        %1613 = vmatpush1.msra.mxu0 0.0
        %1614 = vmatprep.subr.mxu0 0.0
        %1615 = vmatpush1.msra.mxu0 0.0
        %1616 = vmatprep.subr.mxu0 0.0
        %1617 = vmatpush1.msra.mxu0 0.0
        %1618 = vmatprep.subr.mxu0 %v1584
        %1619 = vmatpush1.msra.mxu0 %v1583
        %1620 = vmatprep.subr.mxu0 0.0
        %1621 = vmatpush2.msra.mxu0 0.0
        %1622 = vmatprep.subr.mxu0 0.0
        %1623 = vmatpush2.msra.mxu0 0.0
        %1624 = vmatprep.subr.mxu0 0.0
        %1625 = vmatpush2.msra.mxu0 0.0
        %1626 = vmatprep.subr.mxu0 0.0
        %1627 = vmatpush2.msra.mxu0 0.0
        %1628 = vmatprep.subr.mxu0 0.0
        %1629 = vmatpush2.msra.mxu0 0.0
        %1630 = vmatprep.subr.mxu0 0.0
        %1631 = vmatpush2.msra.mxu0 0.0
        %1632 = vmatprep.subr.mxu0 0.0
        %1633 = vmatpush2.msra.mxu0 0.0
        %1634 = vmatprep.subr.mxu0 0.0
        %1635 = vmatpush2.msra.mxu0 0.0
        %1636 = vmatprep.subr.mxu0 0.0
        %1637 = vmatpush2.msra.mxu0 0.0
        %1638 = vmatprep.subr.mxu0 0.0
        %1639 = vmatpush2.msra.mxu0 0.0
        %1640 = vmatprep.subr.mxu0 0.0
        %1641 = vmatpush2.msra.mxu0 0.0
        %1642 = vmatprep.subr.mxu0 0.0
        %1643 = vmatpush2.msra.mxu0 0.0
        %1644 = vmatprep.subr.mxu0 0.0
        %1645 = vmatpush2.msra.mxu0 0.0
        %1646 = vmatprep.subr.mxu0 0.0
        %1647 = vmatpush2.msra.mxu0 0.0
        %1648 = vmatprep.subr.mxu0 0.0
        %1649 = vmatpush2.msra.mxu0 0.0
        %1650 = vmatprep.subr.mxu0 0.0
        %1651 = vmatpush2.msra.mxu0 0.0
        %1652 = vmatprep.mubr.f32.mxu0 0.0
        %1653 = vmatmul.mubr.f32.gmra.mxu0 %v1586
        %v1654 = vpop.f32.mrf.mxu0
        %v1655 = vadd.f32 0.0, %v1654
        %v1656 = vpop.f32.mrf.mxu0
        %v1657 = vadd.f32 0.0, %v1656
        %1658 = vdwg.mxu0
        %v1659 = vadd.f32 %v1575, %v1655
        %v1660 = vadd.f32 %v1576, %v1657
        %1661 = vrot.lane.b32.xlu0 %v1083, 112
        %v1662 = vpop.permute.xlu0 %1661
        %1663 = vrot.lane.b32.xlu0 %v1084, 112
        %v1664 = vpop.permute.xlu0 %1663
        %v1665 = vsel %vm895, %v1662, %v1664
        %v1666 = vsel %vm895, %v1664, %v1662
        %v1667 = vsel %vm900, %v1665, 0.0
        %v1668 = vsel %vm901, %v1666, 0.0
        %v1670 = vsel %vm310, %v277, 0
        %1672 = vmatprep.subr.mxu0 0.0
        %1673 = vmatpush1.msra.mxu0 0.0
        %1674 = vmatprep.subr.mxu0 0.0
        %1675 = vmatpush1.msra.mxu0 0.0
        %1676 = vmatprep.subr.mxu0 0.0
        %1677 = vmatpush1.msra.mxu0 0.0
        %1678 = vmatprep.subr.mxu0 0.0
        %1679 = vmatpush1.msra.mxu0 0.0
        %1680 = vmatprep.subr.mxu0 0.0
        %1681 = vmatpush1.msra.mxu0 0.0
        %1682 = vmatprep.subr.mxu0 0.0
        %1683 = vmatpush1.msra.mxu0 0.0
        %1684 = vmatprep.subr.mxu0 0.0
        %1685 = vmatpush1.msra.mxu0 0.0
        %1686 = vmatprep.subr.mxu0 0.0
        %1687 = vmatpush1.msra.mxu0 0.0
        %1688 = vmatprep.subr.mxu0 0.0
        %1689 = vmatpush1.msra.mxu0 0.0
        %1690 = vmatprep.subr.mxu0 0.0
        %1691 = vmatpush1.msra.mxu0 0.0
        %1692 = vmatprep.subr.mxu0 0.0
        %1693 = vmatpush1.msra.mxu0 0.0
        %1694 = vmatprep.subr.mxu0 0.0
        %1695 = vmatpush1.msra.mxu0 0.0
        %1696 = vmatprep.subr.mxu0 0.0
        %1697 = vmatpush1.msra.mxu0 0.0
        %1698 = vmatprep.subr.mxu0 0.0
        %1699 = vmatpush1.msra.mxu0 0.0
        %1700 = vmatprep.subr.mxu0 0.0
        %1701 = vmatpush1.msra.mxu0 0.0
        %1702 = vmatprep.subr.mxu0 %v1668
        %1703 = vmatpush1.msra.mxu0 %v1667
        %1704 = vmatprep.subr.mxu0 0.0
        %1705 = vmatpush2.msra.mxu0 0.0
        %1706 = vmatprep.subr.mxu0 0.0
        %1707 = vmatpush2.msra.mxu0 0.0
        %1708 = vmatprep.subr.mxu0 0.0
        %1709 = vmatpush2.msra.mxu0 0.0
        %1710 = vmatprep.subr.mxu0 0.0
        %1711 = vmatpush2.msra.mxu0 0.0
        %1712 = vmatprep.subr.mxu0 0.0
        %1713 = vmatpush2.msra.mxu0 0.0
        %1714 = vmatprep.subr.mxu0 0.0
        %1715 = vmatpush2.msra.mxu0 0.0
        %1716 = vmatprep.subr.mxu0 0.0
        %1717 = vmatpush2.msra.mxu0 0.0
        %1718 = vmatprep.subr.mxu0 0.0
        %1719 = vmatpush2.msra.mxu0 0.0
        %1720 = vmatprep.subr.mxu0 0.0
        %1721 = vmatpush2.msra.mxu0 0.0
        %1722 = vmatprep.subr.mxu0 0.0
        %1723 = vmatpush2.msra.mxu0 0.0
        %1724 = vmatprep.subr.mxu0 0.0
        %1725 = vmatpush2.msra.mxu0 0.0
        %1726 = vmatprep.subr.mxu0 0.0
        %1727 = vmatpush2.msra.mxu0 0.0
        %1728 = vmatprep.subr.mxu0 0.0
        %1729 = vmatpush2.msra.mxu0 0.0
        %1730 = vmatprep.subr.mxu0 0.0
        %1731 = vmatpush2.msra.mxu0 0.0
        %1732 = vmatprep.subr.mxu0 0.0
        %1733 = vmatpush2.msra.mxu0 0.0
        %1734 = vmatprep.subr.mxu0 0.0
        %1735 = vmatpush2.msra.mxu0 0.0
        %1736 = vmatprep.mubr.f32.mxu0 0.0
        %1737 = vmatmul.mubr.f32.gmra.mxu0 %v1670
        %v1738 = vpop.f32.mrf.mxu0
        %v1739 = vadd.f32 0.0, %v1738
        %v1740 = vpop.f32.mrf.mxu0
        %v1741 = vadd.f32 0.0, %v1740
        %1742 = vdwg.mxu0
        %v1743 = vadd.f32 %v1659, %v1739
        %v1744 = vadd.f32 %v1660, %v1741
        %1745 = vrot.lane.b32.xlu0 %v1083, 111
        %v1746 = vpop.permute.xlu0 %1745
        %1747 = vrot.lane.b32.xlu0 %v1084, 111
        %v1748 = vpop.permute.xlu0 %1747
        %v1749 = vsel %vm984, %v1746, %v1748
        %v1750 = vsel %vm984, %v1748, %v1746
        %v1751 = vsel %vm989, %v1749, 0.0
        %v1752 = vsel %vm990, %v1750, 0.0
        %v1754 = vsel %vm310, %v279, 0
        %1756 = vmatprep.subr.mxu0 0.0
        %1757 = vmatpush1.msra.mxu0 0.0
        %1758 = vmatprep.subr.mxu0 0.0
        %1759 = vmatpush1.msra.mxu0 0.0
        %1760 = vmatprep.subr.mxu0 0.0
        %1761 = vmatpush1.msra.mxu0 0.0
        %1762 = vmatprep.subr.mxu0 0.0
        %1763 = vmatpush1.msra.mxu0 0.0
        %1764 = vmatprep.subr.mxu0 0.0
        %1765 = vmatpush1.msra.mxu0 0.0
        %1766 = vmatprep.subr.mxu0 0.0
        %1767 = vmatpush1.msra.mxu0 0.0
        %1768 = vmatprep.subr.mxu0 0.0
        %1769 = vmatpush1.msra.mxu0 0.0
        %1770 = vmatprep.subr.mxu0 0.0
        %1771 = vmatpush1.msra.mxu0 0.0
        %1772 = vmatprep.subr.mxu0 0.0
        %1773 = vmatpush1.msra.mxu0 0.0
        %1774 = vmatprep.subr.mxu0 0.0
        %1775 = vmatpush1.msra.mxu0 0.0
        %1776 = vmatprep.subr.mxu0 0.0
        %1777 = vmatpush1.msra.mxu0 0.0
        %1778 = vmatprep.subr.mxu0 0.0
        %1779 = vmatpush1.msra.mxu0 0.0
        %1780 = vmatprep.subr.mxu0 0.0
        %1781 = vmatpush1.msra.mxu0 0.0
        %1782 = vmatprep.subr.mxu0 0.0
        %1783 = vmatpush1.msra.mxu0 0.0
        %1784 = vmatprep.subr.mxu0 0.0
        %1785 = vmatpush1.msra.mxu0 0.0
        %1786 = vmatprep.subr.mxu0 %v1752
        %1787 = vmatpush1.msra.mxu0 %v1751
        %1788 = vmatprep.subr.mxu0 0.0
        %1789 = vmatpush2.msra.mxu0 0.0
        %1790 = vmatprep.subr.mxu0 0.0
        %1791 = vmatpush2.msra.mxu0 0.0
        %1792 = vmatprep.subr.mxu0 0.0
        %1793 = vmatpush2.msra.mxu0 0.0
        %1794 = vmatprep.subr.mxu0 0.0
        %1795 = vmatpush2.msra.mxu0 0.0
        %1796 = vmatprep.subr.mxu0 0.0
        %1797 = vmatpush2.msra.mxu0 0.0
        %1798 = vmatprep.subr.mxu0 0.0
        %1799 = vmatpush2.msra.mxu0 0.0
        %1800 = vmatprep.subr.mxu0 0.0
        %1801 = vmatpush2.msra.mxu0 0.0
        %1802 = vmatprep.subr.mxu0 0.0
        %1803 = vmatpush2.msra.mxu0 0.0
        %1804 = vmatprep.subr.mxu0 0.0
        %1805 = vmatpush2.msra.mxu0 0.0
        %1806 = vmatprep.subr.mxu0 0.0
        %1807 = vmatpush2.msra.mxu0 0.0
        %1808 = vmatprep.subr.mxu0 0.0
        %1809 = vmatpush2.msra.mxu0 0.0
        %1810 = vmatprep.subr.mxu0 0.0
        %1811 = vmatpush2.msra.mxu0 0.0
        %1812 = vmatprep.subr.mxu0 0.0
        %1813 = vmatpush2.msra.mxu0 0.0
        %1814 = vmatprep.subr.mxu0 0.0
        %1815 = vmatpush2.msra.mxu0 0.0
        %1816 = vmatprep.subr.mxu0 0.0
        %1817 = vmatpush2.msra.mxu0 0.0
        %1818 = vmatprep.subr.mxu0 0.0
        %1819 = vmatpush2.msra.mxu0 0.0
        %1820 = vmatprep.mubr.f32.mxu0 0.0
        %1821 = vmatmul.mubr.f32.gmra.mxu0 %v1754
        %v1822 = vpop.f32.mrf.mxu0
        %v1823 = vadd.f32 0.0, %v1822
        %v1824 = vpop.f32.mrf.mxu0
        %v1825 = vadd.f32 0.0, %v1824
        %1826 = vdwg.mxu0
        %v1827 = vadd.f32 %v1743, %v1823
        %v1828 = vadd.f32 %v1744, %v1825
        %v1829 = vadd.f32 %v1827, %v282
        %v1830 = vadd.f32 %v1828, %v283
        %v1831 = vmax.f32 %v1829, 0.0
        %v1832 = vmax.f32 %v1830, 0.0
        %1833 = vst [vmem:[%s217] sm:$0xff] %v1831
        %1834 = vst [vmem:[%s217 + $0x8] sm:$0xff] %v1832
        %s1835 = sand.u32 %s137, 1
        %s1836 = scalar_lea.sflag [#allocation3], %s1835
        %s1837 = sand.u32 %s137, 1
        %s1838 = smul.addr %s1837, 16
        %s1839 = scalar_lea.vmem [#allocation2], %s1838
        // Predicated region
        $region41: #{tpu_custom_call.1} parent=39 // pred_check
          %p1840 = pneg %p147
        $region42: #{tpu_custom_call.1} parent=39 // pred_check_branch
          %1842 = sbr.rel (%p1840) target = $region44
        $region43: #{tpu_custom_call.1} parent=39 // pred_region
          %s1844 = ssub.s32 256, 256
          %1845 = vsyncadd %s1836, %s1844
          %s1846 = smul.addr %s19, 2
          %s1847 = smul.addr %s1846, 128
          %s1848 = scalar_lea.hbm %s5, %s1847
          %s1850 = sshll.u32 %s1839, 4
          %s1851 = int_to_ptr.vmem [resolvable:$true] %s1850
          %1853 = dma.vmem_to_hbm [thread:$0]  %s1851, 256, %s1848, %s1836
        $region44: #{tpu_custom_call.1} parent=39 // pred_fallthru
          _
      $region40: #{tpu_custom_call.1} parent=5 // pred_fallthru
        _
      %p1854 = scmp.le.s32.totalorder 2, %s14
      // Predicated region
      $region45: #{tpu_custom_call.1} parent=5 // pred_check
        %p1855 = pneg %p1854
      $region46: #{tpu_custom_call.1} parent=5 // pred_check_branch
        %1857 = sbr.rel (%p1855) target = $region48
      $region47: #{tpu_custom_call.1} parent=5 // pred_region
        %s1858 = ssub.s32 %s14, 2
        // Predicated region
        $region49: #{tpu_custom_call.1} parent=47 // pred_check
          %p1859 = pneg %p153
        $region50: #{tpu_custom_call.1} parent=47 // pred_check_branch
          %1861 = sbr.rel (%p1859) target = $region52
        $region51: #{tpu_custom_call.1} parent=47 // pred_region
          %s1862 = sand.u32 %s138, 1
          %s1863 = scalar_lea.sflag [#allocation3], %s1862
          %s1864 = sand.u32 %s138, 1
          %s1865 = smul.addr %s1864, 16
          %s1866 = scalar_lea.vmem [#allocation2], %s1865
          %1867 = dma.done %s1863, 256
        $region52: #{tpu_custom_call.1} parent=47 // pred_fallthru
          _
      $region48: #{tpu_custom_call.1} parent=5 // pred_fallthru
        _
    $region6: #{tpu_custom_call.1} parent=1 // loop_footer
      %s18 = sadd.s32 1, %s14
    $region7: #{tpu_custom_call.1} parent=1 // loop_footer_branch
      %13 = sbr.rel target = $region3
    $region8: #{tpu_custom_call.1} parent=1 // loop_exit
      _
    %1868 = vsyncpa [#allocation3], 1
    %s1869 = scalar_lea.sflag [#allocation3], 1
    %1870 = vsyncpa %s1869, 1

</llo_original>
